<compile_context>
chip_gen: v6e
topology: v6e:2x2x1
jax: 0.10.0
libtpu: 0.0.40
codegen_flags: <defaults>
</compile_context>

<pallas_src>
import functools

import jax
import jax.numpy as jnp
from jax import lax
from jax.experimental import pallas as pl
from jax.experimental.pallas import tpu as pltpu


def linear_rnn_kernel(x_ref, w_in_t_ref, a_ref, a2_ref, w_out_t_ref, out_ref,
                      h_carry, hid_sl, y_sl):
    """One (batch-block, time-chunk) grid step.

    x_ref      : (TL, BB, D_in)   bf16 input tile (time-major)
    w_in_t_ref : (D_in, Hp)       bf16, W_in^T (padded, pre-transposed)
    a_ref      : (Hp, Hp)         f32,  W_h^T (padded)
    a2_ref     : (Hp, Hp)         f32,  (W_h^T)^2 (padded)
    w_out_t_ref: (Hp, Dp_out)     bf16, W_out^T (padded)
    out_ref    : (TL, BB, Dp_out) f32 output tile (lane-padded)
    h_carry    : (BB, Hp)         f32 scratch: hidden state carried across chunks
    hid_sl     : (TL, BB, Hp)     f32 scratch: xh, then hidden states
    y_sl       : (TL, BB, Hp)     f32 scratch: xh @ A (for 2-step fusion)
    """
    TL, BB, D_in = x_ref.shape
    Hp = a_ref.shape[0]
    Dp_out = out_ref.shape[-1]

    # Fresh hidden state at the first time chunk of every batch block.
    @pl.when(pl.program_id(1) == 0)
    def _():
        h_carry[...] = jnp.zeros_like(h_carry)

    a = a_ref[...]      # (Hp, Hp) = W_h^T
    a2 = a2_ref[...]    # (Hp, Hp) = (W_h^T)^2

    # ---- Off-chain (throughput) work ------------------------------------
    # Input projection for the whole chunk: bf16 operands, f32 accumulation.
    xh = jnp.dot(x_ref[...].reshape(TL * BB, D_in), w_in_t_ref[...],
                 preferred_element_type=jnp.float32)            # (TL*BB, Hp)
    # xh @ A for the 2-step fused recurrence, also off the serial chain.
    y = jnp.dot(xh, a, preferred_element_type=jnp.float32)       # (TL*BB, Hp)

    # Park both in time-major VMEM slabs: the serial loop reads contiguous
    # (BB, Hp) tiles and never keeps TL live hidden states in vregs.
    hid_sl[...] = xh.reshape(TL, BB, Hp)
    y_sl[...] = y.reshape(TL, BB, Hp)

    # ---- Serial recurrence: 2 timesteps per dependent matmul ------------
    #   h_t     = xh_t     + h_{t-1} @ A
    #   h_{t+1} = xh_{t+1} + xh_t @ A + h_{t-1} @ A^2
    # Both matmuls in a pair depend only on h_{t-1}; chain length = TL/2.
    def pair_step(i, prev):
        t = 2 * i
        h_a = jnp.dot(prev, a, preferred_element_type=jnp.float32)
        h_a2 = jnp.dot(prev, a2, preferred_element_type=jnp.float32)
        h_t = hid_sl[t] + h_a
        h_t1 = hid_sl[t + 1] + y_sl[t] + h_a2
        hid_sl[t] = h_t
        hid_sl[t + 1] = h_t1
        return h_t1

    n_pairs = TL // 2
    h = h_carry[...]
    if n_pairs > 0:
        if n_pairs <= 16:
            # Small fixed chunk: static unroll (indices are compile-time).
            for i in range(n_pairs):
                h = pair_step(i, h)
        else:
            # Large chunk: bounded code size, 4 pairs per scheduled body.
            h = lax.fori_loop(0, n_pairs, pair_step, h, unroll=4)
    if TL % 2 == 1:                      # odd-length chunk: one plain step
        t = TL - 1
        h = hid_sl[t] + jnp.dot(h, a, preferred_element_type=jnp.float32)
        hid_sl[t] = h
    h_carry[...] = h

    # ---- Off-chain output projection; lane-dense (Dp_out is 128-padded) --
    hidden = hid_sl[...].reshape(TL * BB, Hp).astype(jnp.bfloat16)
    out = jnp.dot(hidden, w_out_t_ref[...], preferred_element_type=jnp.float32)
    out_ref[...] = out.reshape(TL, BB, Dp_out).astype(out_ref.dtype)


def _round_up(v, m):
    return ((v + m - 1) // m) * m


def _pick_time_chunk(L, BB, Hp, max_tl=128, slab_budget_bytes=8 << 20):
    """Largest multiple-of-8 divisor of L whose (TL, BB, Hp) f32 slab fits budget."""
    per_row = BB * Hp * 4
    cap = min(max_tl, max(8, (slab_budget_bytes // per_row) // 8 * 8))
    if L <= cap:
        return L
    for tl in range(cap, 7, -8):
        if L % tl == 0:
            return tl
    # No sublane-aligned divisor (e.g. prime L): run the sequence as one chunk.
    # The recurrence is a bounded fori_loop over VMEM scratch, so this costs
    # slab VMEM only, not unrolled code size / compile time.
    return L


@functools.partial(jax.jit, static_argnames=("block_b", "block_l"))
def linear_rnn(x, w_in, w_h, w_out, *, block_b=None, block_l=None):
    """x: (B, L, D_in) -> (B, L, D_out).

    block_b: batch rows per grid block. Default keeps the whole batch in one
             block (best on single-TC v5e/v6e: the serial chain is not
             duplicated).  On v7x pass block_b = B // 2 (a multiple of 8) so
             the "parallel" batch axis shards across the two TensorCores.
    block_l: timesteps per grid block (time axis is pipelined + carried).
    """
    B, L, D_in = x.shape
    H = w_h.shape[0]
    D_out = w_out.shape[0]

    Hp = _round_up(H, 128)         # full-lane MXU steps on the serial chain
    Dp_out = _round_up(D_out, 128)  # unmasked full-lane output stores

    BB = B if block_b is None else block_b
    assert B % BB == 0
    assert BB == B or BB % 8 == 0, "block_b must equal B or be a multiple of 8"

    TL = _pick_time_chunk(L, BB, Hp) if block_l is None else block_l
    assert L % TL == 0

    # One-time layout plumbing (wrapper side, never in the kernel):
    # transpose + zero-pad weights, cast x / W_in / W_out to bf16 (f32 accum
    # in-kernel); the recurrence matrices A, A2 and the carry stay f32.
    f32 = jnp.float32
    w_in_t = jnp.zeros((D_in, Hp), f32).at[:, :H].set(jnp.asarray(w_in, f32).T)
    a = jnp.zeros((Hp, Hp), f32).at[:H, :H].set(jnp.asarray(w_h, f32).T)
    a2 = jnp.dot(a, a, precision=lax.Precision.HIGHEST)      # (W_h^T)^2
    w_out_t = jnp.zeros((Hp, Dp_out), f32).at[:H, :D_out].set(
        jnp.asarray(w_out, f32).T)

    x_t = jnp.transpose(x, (1, 0, 2)).astype(jnp.bfloat16)   # time-major (L,B,D_in)
    w_in_t = w_in_t.astype(jnp.bfloat16)
    w_out_t = w_out_t.astype(jnp.bfloat16)

    grid = (B // BB, L // TL)

    # Explicit VMEM budget: double-buffered x/out tiles + (double-buffered)
    # weights + scratch slabs, raised above the 16/32 MiB scoped defaults and
    # capped at v7x's 64 MiB physical VMEM.
    est = (2 * TL * BB * D_in * 2
           + 2 * TL * BB * Dp_out * 4
           + 2 * (D_in * Hp * 2 + Hp * Dp_out * 2 + 2 * Hp * Hp * 4)
           + BB * Hp * 4 + 2 * TL * BB * Hp * 4)
    vmem_limit = int(min(64 << 20, max(32 << 20, 2 * est)))

    out_padded = pl.pallas_call(
        linear_rnn_kernel,
        out_shape=jax.ShapeDtypeStruct((L, B, Dp_out), jnp.float32),
        grid_spec=pltpu.PrefetchScalarGridSpec(
            num_scalar_prefetch=0,
            grid=grid,
            in_specs=[
                pl.BlockSpec((TL, BB, D_in), lambda b, t: (t, b, 0)),
                pl.BlockSpec((D_in, Hp), lambda b, t: (0, 0)),
                pl.BlockSpec((Hp, Hp), lambda b, t: (0, 0)),
                pl.BlockSpec((Hp, Hp), lambda b, t: (0, 0)),
                pl.BlockSpec((Hp, Dp_out), lambda b, t: (0, 0)),
            ],
            out_specs=pl.BlockSpec((TL, BB, Dp_out), lambda b, t: (t, b, 0)),
            scratch_shapes=[
                pltpu.VMEM((BB, Hp), jnp.float32),       # carried hidden state
                pltpu.VMEM((TL, BB, Hp), jnp.float32),   # xh -> hidden slab
                pltpu.VMEM((TL, BB, Hp), jnp.float32),   # xh @ A slab
            ],
        ),
        compiler_params=pltpu.CompilerParams(
            dimension_semantics=("parallel", "arbitrary"),
            vmem_limit_bytes=vmem_limit,
        ),
    )(x_t, w_in_t, a, a2, w_out_t)

    # Drop lane padding and return to batch-major (pure XLA layout work).
    return jnp.transpose(out_padded[:, :, :D_out], (1, 0, 2)).astype(x.dtype)


def linear_rnn_ref(x, w_in, w_h, w_out):
    """Pure-JAX reference matching the PyTorch forward."""
    xh = jnp.einsum("bld,hd->blh", x, w_in)

    def step(h, x_t):
        h_new = x_t + h @ w_h.T
        return h_new, h_new

    h0 = jnp.zeros((x.shape[0], w_h.shape[0]), x.dtype)
    _, hs = lax.scan(step, h0, jnp.transpose(xh, (1, 0, 2)))
    hidden = jnp.transpose(hs, (1, 0, 2))
    return jnp.einsum("blh,oh->blo", hidden, w_out)


if __name__ == "__main__":
    # Small shapes implied by the module: batch=2, seq=8, input_dim=16,
    # hid_dim=32, output_dim=8.
    B, L, D_IN, H, D_OUT = 2, 8, 16, 32, 8

    key = jax.random.PRNGKey(0)
    k_x, k_in, k_h, k_out = jax.random.split(key, 4)

    # Deterministic parameter init mirroring the PyTorch module:
    #  - nn.Linear default: U(-1/sqrt(fan_in), 1/sqrt(fan_in))
    #  - hidden_ff.weight  = diag(rand(H))
    bound_in = 1.0 / (D_IN ** 0.5)
    bound_out = 1.0 / (H ** 0.5)
    w_in = jax.random.uniform(k_in, (H, D_IN), jnp.float32, -bound_in, bound_in)
    w_h = jnp.diag(jax.random.uniform(k_h, (H,), jnp.float32))
    w_out = jax.random.uniform(k_out, (D_OUT, H), jnp.float32, -bound_out, bound_out)

    x = jax.random.normal(k_x, (B, L, D_IN), jnp.float32)

    out = jax.block_until_ready(linear_rnn(x, w_in, w_h, w_out))
    ref = linear_rnn_ref(x, w_in, w_h, w_out)

    assert out.shape == (B, L, D_OUT)
    # Kernel uses explicit bf16 operands + 2-step fused recurrence (A^2 path),
    # which reorders bf16-level roundings relative to the step-by-step f32
    # (default-precision) reference; allow bf16-scale drift.
    assert jnp.allclose(out, ref, rtol=3e-2, atol=3e-2), float(
        jnp.max(jnp.abs(out - ref)))

    print("KERNEL_OK")
</pallas_src>

<mosaic_0001>
module attributes {stable_mosaic.version = 11 : i64} {
  func.func @linear_rnn_kernel(%arg0: i32, %arg1: i32, %arg2: memref<8x2x16xbf16, #tpu.memory_space<vmem>>, %arg3: memref<16x128xbf16, #tpu.memory_space<vmem>>, %arg4: memref<128x128xf32, #tpu.memory_space<vmem>>, %arg5: memref<128x128xf32, #tpu.memory_space<vmem>>, %arg6: memref<128x128xbf16, #tpu.memory_space<vmem>>, %arg7: memref<8x2x128xf32, #tpu.memory_space<vmem>>, %arg8: memref<2x128xf32, #tpu.memory_space<vmem>>, %arg9: memref<8x2x128xf32, #tpu.memory_space<vmem>>, %arg10: memref<8x2x128xf32, #tpu.memory_space<vmem>>) attributes {dimension_semantics = [#tpu.dimension_semantics<parallel>, #tpu.dimension_semantics<arbitrary>], iteration_bounds = array<i64: 1, 1>, scalar_prefetch = 0 : i64, scratch_operands = 3 : i64, tpu.core_type = #tpu.core_type<tc>, window_params = [{transform_indices = @transform_0, window_bounds = array<i64: 8, 2, 16>}, {pipeline_mode = #tpu.pipeline_mode<synchronous>, transform_indices = @transform_1, window_bounds = array<i64: 16, 128>}, {pipeline_mode = #tpu.pipeline_mode<synchronous>, transform_indices = @transform_2, window_bounds = array<i64: 128, 128>}, {pipeline_mode = #tpu.pipeline_mode<synchronous>, transform_indices = @transform_3, window_bounds = array<i64: 128, 128>}, {pipeline_mode = #tpu.pipeline_mode<synchronous>, transform_indices = @transform_4, window_bounds = array<i64: 128, 128>}, {transform_indices = @transform_5, window_bounds = array<i64: 8, 2, 128>}]} {
    %c0_i32 = arith.constant 0 : i32
    %0 = arith.cmpi eq, %arg1, %c0_i32 : i32
    %1 = arith.extui %0 : i1 to i32
    %c0_i32_0 = arith.constant 0 : i32
    %2 = arith.cmpi ne, %1, %c0_i32_0 : i32
    scf.if %2 {
      %cst_90 = arith.constant 0.000000e+00 : f32
      %91 = vector.broadcast %cst_90 : f32 to vector<2x128xf32>
      %c0_91 = arith.constant 0 : index
      %c0_92 = arith.constant 0 : index
      %92 = vector.load %arg8[%c0_91, %c0_92] : memref<2x128xf32, #tpu.memory_space<vmem>>, vector<2x128xf32>
      tpu.vector_store %arg8[%c0_91, %c0_92], %91 {strides = array<i32>} : memref<2x128xf32, #tpu.memory_space<vmem>>, vector<2x128xf32>,
    } else {
    }
    %c0 = arith.constant 0 : index
    %c0_1 = arith.constant 0 : index
    %3 = vector.load %arg4[%c0, %c0_1] : memref<128x128xf32, #tpu.memory_space<vmem>>, vector<128x128xf32>
    %c0_2 = arith.constant 0 : index
    %c0_3 = arith.constant 0 : index
    %4 = vector.load %arg5[%c0_2, %c0_3] : memref<128x128xf32, #tpu.memory_space<vmem>>, vector<128x128xf32>
    %c0_4 = arith.constant 0 : index
    %c0_5 = arith.constant 0 : index
    %c0_6 = arith.constant 0 : index
    %5 = vector.load %arg2[%c0_4, %c0_5, %c0_6] : memref<8x2x16xbf16, #tpu.memory_space<vmem>>, vector<8x2x16xbf16>
    %6 = vector.shape_cast %5 : vector<8x2x16xbf16> to vector<16x16xbf16>
    %c0_7 = arith.constant 0 : index
    %c0_8 = arith.constant 0 : index
    %7 = vector.load %arg3[%c0_7, %c0_8] : memref<16x128xbf16, #tpu.memory_space<vmem>>, vector<16x128xbf16>
    %cst = arith.constant dense<0.000000e+00> : vector<16x128xf32>
    %8 = tpu.matmul %6, %7, %cst {dimension_numbers = #tpu.dot_dimension_numbers<[1], [0], [0], [1], [0, 0, 1, 1], [], []>} : vector<16x16xbf16>, vector<16x128xbf16>, vector<16x128xf32> -> vector<16x128xf32>
    %cst_9 = arith.constant dense<0.000000e+00> : vector<16x128xf32>
    %9 = tpu.matmul %8, %3, %cst_9 {dimension_numbers = #tpu.dot_dimension_numbers<[1], [0], [0], [1], [0, 0, 1, 1], [], []>} : vector<16x128xf32>, vector<128x128xf32>, vector<16x128xf32> -> vector<16x128xf32>
    %10 = vector.shape_cast %8 : vector<16x128xf32> to vector<8x2x128xf32>
    %c0_10 = arith.constant 0 : index
    %c0_11 = arith.constant 0 : index
    %c0_12 = arith.constant 0 : index
    %11 = vector.load %arg9[%c0_10, %c0_11, %c0_12] : memref<8x2x128xf32, #tpu.memory_space<vmem>>, vector<8x2x128xf32>
    tpu.vector_store %arg9[%c0_10, %c0_11, %c0_12], %10 {strides = array<i32>} : memref<8x2x128xf32, #tpu.memory_space<vmem>>, vector<8x2x128xf32>,
    %12 = vector.shape_cast %9 : vector<16x128xf32> to vector<8x2x128xf32>
    %c0_13 = arith.constant 0 : index
    %c0_14 = arith.constant 0 : index
    %c0_15 = arith.constant 0 : index
    %13 = vector.load %arg10[%c0_13, %c0_14, %c0_15] : memref<8x2x128xf32, #tpu.memory_space<vmem>>, vector<8x2x128xf32>
    tpu.vector_store %arg10[%c0_13, %c0_14, %c0_15], %12 {strides = array<i32>} : memref<8x2x128xf32, #tpu.memory_space<vmem>>, vector<8x2x128xf32>,
    %c0_16 = arith.constant 0 : index
    %c0_17 = arith.constant 0 : index
    %14 = vector.load %arg8[%c0_16, %c0_17] : memref<2x128xf32, #tpu.memory_space<vmem>>, vector<2x128xf32>
    %cst_18 = arith.constant dense<0.000000e+00> : vector<2x128xf32>
    %15 = tpu.matmul %14, %3, %cst_18 {dimension_numbers = #tpu.dot_dimension_numbers<[1], [0], [0], [1], [0, 0, 1, 1], [], []>} : vector<2x128xf32>, vector<128x128xf32>, vector<2x128xf32> -> vector<2x128xf32>
    %cst_19 = arith.constant dense<0.000000e+00> : vector<2x128xf32>
    %16 = tpu.matmul %14, %4, %cst_19 {dimension_numbers = #tpu.dot_dimension_numbers<[1], [0], [0], [1], [0, 0, 1, 1], [], []>} : vector<2x128xf32>, vector<128x128xf32>, vector<2x128xf32> -> vector<2x128xf32>
    %c0_20 = arith.constant 0 : index
    %c0_21 = arith.constant 0 : index
    %c0_22 = arith.constant 0 : index
    %17 = vector.load %arg9[%c0_20, %c0_21, %c0_22] : memref<8x2x128xf32, #tpu.memory_space<vmem>>, vector<1x2x128xf32>
    %18 = vector.shape_cast %17 : vector<1x2x128xf32> to vector<2x128xf32>
    %19 = arith.addf %18, %15 : vector<2x128xf32>
    %c1 = arith.constant 1 : index
    %c0_23 = arith.constant 0 : index
    %c0_24 = arith.constant 0 : index
    %20 = vector.load %arg9[%c1, %c0_23, %c0_24] : memref<8x2x128xf32, #tpu.memory_space<vmem>>, vector<1x2x128xf32>
    %21 = vector.shape_cast %20 : vector<1x2x128xf32> to vector<2x128xf32>
    %c0_25 = arith.constant 0 : index
    %c0_26 = arith.constant 0 : index
    %c0_27 = arith.constant 0 : index
    %22 = vector.load %arg10[%c0_25, %c0_26, %c0_27] : memref<8x2x128xf32, #tpu.memory_space<vmem>>, vector<1x2x128xf32>
    %23 = vector.shape_cast %22 : vector<1x2x128xf32> to vector<2x128xf32>
    %24 = arith.addf %21, %23 : vector<2x128xf32>
    %25 = arith.addf %24, %16 : vector<2x128xf32>
    %c0_28 = arith.constant 0 : index
    %c0_29 = arith.constant 0 : index
    %c0_30 = arith.constant 0 : index
    %26 = vector.load %arg9[%c0_28, %c0_29, %c0_30] : memref<8x2x128xf32, #tpu.memory_space<vmem>>, vector<1x2x128xf32>
    %27 = vector.shape_cast %26 : vector<1x2x128xf32> to vector<2x128xf32>
    %28 = vector.shape_cast %19 : vector<2x128xf32> to vector<1x2x128xf32>
    tpu.vector_store %arg9[%c0_28, %c0_29, %c0_30], %28 {strides = array<i32>} : memref<8x2x128xf32, #tpu.memory_space<vmem>>, vector<1x2x128xf32>,
    %c1_31 = arith.constant 1 : index
    %c0_32 = arith.constant 0 : index
    %c0_33 = arith.constant 0 : index
    %29 = vector.load %arg9[%c1_31, %c0_32, %c0_33] : memref<8x2x128xf32, #tpu.memory_space<vmem>>, vector<1x2x128xf32>
    %30 = vector.shape_cast %29 : vector<1x2x128xf32> to vector<2x128xf32>
    %31 = vector.shape_cast %25 : vector<2x128xf32> to vector<1x2x128xf32>
    tpu.vector_store %arg9[%c1_31, %c0_32, %c0_33], %31 {strides = array<i32>} : memref<8x2x128xf32, #tpu.memory_space<vmem>>, vector<1x2x128xf32>,
    %cst_34 = arith.constant dense<0.000000e+00> : vector<2x128xf32>
    %32 = tpu.matmul %25, %3, %cst_34 {dimension_numbers = #tpu.dot_dimension_numbers<[1], [0], [0], [1], [0, 0, 1, 1], [], []>} : vector<2x128xf32>, vector<128x128xf32>, vector<2x128xf32> -> vector<2x128xf32>
    %cst_35 = arith.constant dense<0.000000e+00> : vector<2x128xf32>
    %33 = tpu.matmul %25, %4, %cst_35 {dimension_numbers = #tpu.dot_dimension_numbers<[1], [0], [0], [1], [0, 0, 1, 1], [], []>} : vector<2x128xf32>, vector<128x128xf32>, vector<2x128xf32> -> vector<2x128xf32>
    %c2 = arith.constant 2 : index
    %c0_36 = arith.constant 0 : index
    %c0_37 = arith.constant 0 : index
    %34 = vector.load %arg9[%c2, %c0_36, %c0_37] : memref<8x2x128xf32, #tpu.memory_space<vmem>>, vector<1x2x128xf32>
    %35 = vector.shape_cast %34 : vector<1x2x128xf32> to vector<2x128xf32>
    %36 = arith.addf %35, %32 : vector<2x128xf32>
    %c3 = arith.constant 3 : index
    %c0_38 = arith.constant 0 : index
    %c0_39 = arith.constant 0 : index
    %37 = vector.load %arg9[%c3, %c0_38, %c0_39] : memref<8x2x128xf32, #tpu.memory_space<vmem>>, vector<1x2x128xf32>
    %38 = vector.shape_cast %37 : vector<1x2x128xf32> to vector<2x128xf32>
    %c2_40 = arith.constant 2 : index
    %c0_41 = arith.constant 0 : index
    %c0_42 = arith.constant 0 : index
    %39 = vector.load %arg10[%c2_40, %c0_41, %c0_42] : memref<8x2x128xf32, #tpu.memory_space<vmem>>, vector<1x2x128xf32>
    %40 = vector.shape_cast %39 : vector<1x2x128xf32> to vector<2x128xf32>
    %41 = arith.addf %38, %40 : vector<2x128xf32>
    %42 = arith.addf %41, %33 : vector<2x128xf32>
    %c2_43 = arith.constant 2 : index
    %c0_44 = arith.constant 0 : index
    %c0_45 = arith.constant 0 : index
    %43 = vector.load %arg9[%c2_43, %c0_44, %c0_45] : memref<8x2x128xf32, #tpu.memory_space<vmem>>, vector<1x2x128xf32>
    %44 = vector.shape_cast %43 : vector<1x2x128xf32> to vector<2x128xf32>
    %45 = vector.shape_cast %36 : vector<2x128xf32> to vector<1x2x128xf32>
    tpu.vector_store %arg9[%c2_43, %c0_44, %c0_45], %45 {strides = array<i32>} : memref<8x2x128xf32, #tpu.memory_space<vmem>>, vector<1x2x128xf32>,
    %c3_46 = arith.constant 3 : index
    %c0_47 = arith.constant 0 : index
    %c0_48 = arith.constant 0 : index
    %46 = vector.load %arg9[%c3_46, %c0_47, %c0_48] : memref<8x2x128xf32, #tpu.memory_space<vmem>>, vector<1x2x128xf32>
    %47 = vector.shape_cast %46 : vector<1x2x128xf32> to vector<2x128xf32>
    %48 = vector.shape_cast %42 : vector<2x128xf32> to vector<1x2x128xf32>
    tpu.vector_store %arg9[%c3_46, %c0_47, %c0_48], %48 {strides = array<i32>} : memref<8x2x128xf32, #tpu.memory_space<vmem>>, vector<1x2x128xf32>,
    %cst_49 = arith.constant dense<0.000000e+00> : vector<2x128xf32>
    %49 = tpu.matmul %42, %3, %cst_49 {dimension_numbers = #tpu.dot_dimension_numbers<[1], [0], [0], [1], [0, 0, 1, 1], [], []>} : vector<2x128xf32>, vector<128x128xf32>, vector<2x128xf32> -> vector<2x128xf32>
    %cst_50 = arith.constant dense<0.000000e+00> : vector<2x128xf32>
    %50 = tpu.matmul %42, %4, %cst_50 {dimension_numbers = #tpu.dot_dimension_numbers<[1], [0], [0], [1], [0, 0, 1, 1], [], []>} : vector<2x128xf32>, vector<128x128xf32>, vector<2x128xf32> -> vector<2x128xf32>
    %c4 = arith.constant 4 : index
    %c0_51 = arith.constant 0 : index
    %c0_52 = arith.constant 0 : index
    %51 = vector.load %arg9[%c4, %c0_51, %c0_52] : memref<8x2x128xf32, #tpu.memory_space<vmem>>, vector<1x2x128xf32>
    %52 = vector.shape_cast %51 : vector<1x2x128xf32> to vector<2x128xf32>
    %53 = arith.addf %52, %49 : vector<2x128xf32>
    %c5 = arith.constant 5 : index
    %c0_53 = arith.constant 0 : index
    %c0_54 = arith.constant 0 : index
    %54 = vector.load %arg9[%c5, %c0_53, %c0_54] : memref<8x2x128xf32, #tpu.memory_space<vmem>>, vector<1x2x128xf32>
    %55 = vector.shape_cast %54 : vector<1x2x128xf32> to vector<2x128xf32>
    %c4_55 = arith.constant 4 : index
    %c0_56 = arith.constant 0 : index
    %c0_57 = arith.constant 0 : index
    %56 = vector.load %arg10[%c4_55, %c0_56, %c0_57] : memref<8x2x128xf32, #tpu.memory_space<vmem>>, vector<1x2x128xf32>
    %57 = vector.shape_cast %56 : vector<1x2x128xf32> to vector<2x128xf32>
    %58 = arith.addf %55, %57 : vector<2x128xf32>
    %59 = arith.addf %58, %50 : vector<2x128xf32>
    %c4_58 = arith.constant 4 : index
    %c0_59 = arith.constant 0 : index
    %c0_60 = arith.constant 0 : index
    %60 = vector.load %arg9[%c4_58, %c0_59, %c0_60] : memref<8x2x128xf32, #tpu.memory_space<vmem>>, vector<1x2x128xf32>
    %61 = vector.shape_cast %60 : vector<1x2x128xf32> to vector<2x128xf32>
    %62 = vector.shape_cast %53 : vector<2x128xf32> to vector<1x2x128xf32>
    tpu.vector_store %arg9[%c4_58, %c0_59, %c0_60], %62 {strides = array<i32>} : memref<8x2x128xf32, #tpu.memory_space<vmem>>, vector<1x2x128xf32>,
    %c5_61 = arith.constant 5 : index
    %c0_62 = arith.constant 0 : index
    %c0_63 = arith.constant 0 : index
    %63 = vector.load %arg9[%c5_61, %c0_62, %c0_63] : memref<8x2x128xf32, #tpu.memory_space<vmem>>, vector<1x2x128xf32>
    %64 = vector.shape_cast %63 : vector<1x2x128xf32> to vector<2x128xf32>
    %65 = vector.shape_cast %59 : vector<2x128xf32> to vector<1x2x128xf32>
    tpu.vector_store %arg9[%c5_61, %c0_62, %c0_63], %65 {strides = array<i32>} : memref<8x2x128xf32, #tpu.memory_space<vmem>>, vector<1x2x128xf32>,
    %cst_64 = arith.constant dense<0.000000e+00> : vector<2x128xf32>
    %66 = tpu.matmul %59, %3, %cst_64 {dimension_numbers = #tpu.dot_dimension_numbers<[1], [0], [0], [1], [0, 0, 1, 1], [], []>} : vector<2x128xf32>, vector<128x128xf32>, vector<2x128xf32> -> vector<2x128xf32>
    %cst_65 = arith.constant dense<0.000000e+00> : vector<2x128xf32>
    %67 = tpu.matmul %59, %4, %cst_65 {dimension_numbers = #tpu.dot_dimension_numbers<[1], [0], [0], [1], [0, 0, 1, 1], [], []>} : vector<2x128xf32>, vector<128x128xf32>, vector<2x128xf32> -> vector<2x128xf32>
    %c6 = arith.constant 6 : index
    %c0_66 = arith.constant 0 : index
    %c0_67 = arith.constant 0 : index
    %68 = vector.load %arg9[%c6, %c0_66, %c0_67] : memref<8x2x128xf32, #tpu.memory_space<vmem>>, vector<1x2x128xf32>
    %69 = vector.shape_cast %68 : vector<1x2x128xf32> to vector<2x128xf32>
    %70 = arith.addf %69, %66 : vector<2x128xf32>
    %c7 = arith.constant 7 : index
    %c0_68 = arith.constant 0 : index
    %c0_69 = arith.constant 0 : index
    %71 = vector.load %arg9[%c7, %c0_68, %c0_69] : memref<8x2x128xf32, #tpu.memory_space<vmem>>, vector<1x2x128xf32>
    %72 = vector.shape_cast %71 : vector<1x2x128xf32> to vector<2x128xf32>
    %c6_70 = arith.constant 6 : index
    %c0_71 = arith.constant 0 : index
    %c0_72 = arith.constant 0 : index
    %73 = vector.load %arg10[%c6_70, %c0_71, %c0_72] : memref<8x2x128xf32, #tpu.memory_space<vmem>>, vector<1x2x128xf32>
    %74 = vector.shape_cast %73 : vector<1x2x128xf32> to vector<2x128xf32>
    %75 = arith.addf %72, %74 : vector<2x128xf32>
    %76 = arith.addf %75, %67 : vector<2x128xf32>
    %c6_73 = arith.constant 6 : index
    %c0_74 = arith.constant 0 : index
    %c0_75 = arith.constant 0 : index
    %77 = vector.load %arg9[%c6_73, %c0_74, %c0_75] : memref<8x2x128xf32, #tpu.memory_space<vmem>>, vector<1x2x128xf32>
    %78 = vector.shape_cast %77 : vector<1x2x128xf32> to vector<2x128xf32>
    %79 = vector.shape_cast %70 : vector<2x128xf32> to vector<1x2x128xf32>
    tpu.vector_store %arg9[%c6_73, %c0_74, %c0_75], %79 {strides = array<i32>} : memref<8x2x128xf32, #tpu.memory_space<vmem>>, vector<1x2x128xf32>,
    %c7_76 = arith.constant 7 : index
    %c0_77 = arith.constant 0 : index
    %c0_78 = arith.constant 0 : index
    %80 = vector.load %arg9[%c7_76, %c0_77, %c0_78] : memref<8x2x128xf32, #tpu.memory_space<vmem>>, vector<1x2x128xf32>
    %81 = vector.shape_cast %80 : vector<1x2x128xf32> to vector<2x128xf32>
    %82 = vector.shape_cast %76 : vector<2x128xf32> to vector<1x2x128xf32>
    tpu.vector_store %arg9[%c7_76, %c0_77, %c0_78], %82 {strides = array<i32>} : memref<8x2x128xf32, #tpu.memory_space<vmem>>, vector<1x2x128xf32>,
    %c0_79 = arith.constant 0 : index
    %c0_80 = arith.constant 0 : index
    %83 = vector.load %arg8[%c0_79, %c0_80] : memref<2x128xf32, #tpu.memory_space<vmem>>, vector<2x128xf32>
    tpu.vector_store %arg8[%c0_79, %c0_80], %76 {strides = array<i32>} : memref<2x128xf32, #tpu.memory_space<vmem>>, vector<2x128xf32>,
    %c0_81 = arith.constant 0 : index
    %c0_82 = arith.constant 0 : index
    %c0_83 = arith.constant 0 : index
    %84 = vector.load %arg9[%c0_81, %c0_82, %c0_83] : memref<8x2x128xf32, #tpu.memory_space<vmem>>, vector<8x2x128xf32>
    %85 = vector.shape_cast %84 : vector<8x2x128xf32> to vector<16x128xf32>
    %86 = arith.truncf %85 : vector<16x128xf32> to vector<16x128xbf16>
    %c0_84 = arith.constant 0 : index
    %c0_85 = arith.constant 0 : index
    %87 = vector.load %arg6[%c0_84, %c0_85] : memref<128x128xbf16, #tpu.memory_space<vmem>>, vector<128x128xbf16>
    %cst_86 = arith.constant dense<0.000000e+00> : vector<16x128xf32>
    %88 = tpu.matmul %86, %87, %cst_86 {dimension_numbers = #tpu.dot_dimension_numbers<[1], [0], [0], [1], [0, 0, 1, 1], [], []>} : vector<16x128xbf16>, vector<128x128xbf16>, vector<16x128xf32> -> vector<16x128xf32>
    %89 = vector.shape_cast %88 : vector<16x128xf32> to vector<8x2x128xf32>
    %c0_87 = arith.constant 0 : index
    %c0_88 = arith.constant 0 : index
    %c0_89 = arith.constant 0 : index
    %90 = vector.load %arg7[%c0_87, %c0_88, %c0_89] : memref<8x2x128xf32, #tpu.memory_space<vmem>>, vector<8x2x128xf32>
    tpu.vector_store %arg7[%c0_87, %c0_88, %c0_89], %89 {strides = array<i32>} : memref<8x2x128xf32, #tpu.memory_space<vmem>>, vector<8x2x128xf32>,
    return
  }
  func.func @transform_0(%arg0: i32, %arg1: i32) -> (i32, i32, i32) {
    %c0_i32 = arith.constant 0 : i32
    %c0_i32_0 = arith.constant 0 : i32
    return %arg1, %arg0, %c0_i32 : i32, i32, i32
  }
  func.func @transform_1(%arg0: i32, %arg1: i32) -> (i32, i32) {
    %c0_i32 = arith.constant 0 : i32
    %c0_i32_0 = arith.constant 0 : i32
    %c0_i32_1 = arith.constant 0 : i32
    return %c0_i32, %c0_i32_0 : i32, i32
  }
  func.func @transform_2(%arg0: i32, %arg1: i32) -> (i32, i32) {
    %c0_i32 = arith.constant 0 : i32
    %c0_i32_0 = arith.constant 0 : i32
    %c0_i32_1 = arith.constant 0 : i32
    return %c0_i32, %c0_i32_0 : i32, i32
  }
  func.func @transform_3(%arg0: i32, %arg1: i32) -> (i32, i32) {
    %c0_i32 = arith.constant 0 : i32
    %c0_i32_0 = arith.constant 0 : i32
    %c0_i32_1 = arith.constant 0 : i32
    return %c0_i32, %c0_i32_0 : i32, i32
  }
  func.func @transform_4(%arg0: i32, %arg1: i32) -> (i32, i32) {
    %c0_i32 = arith.constant 0 : i32
    %c0_i32_0 = arith.constant 0 : i32
    %c0_i32_1 = arith.constant 0 : i32
    return %c0_i32, %c0_i32_0 : i32, i32
  }
  func.func @transform_5(%arg0: i32, %arg1: i32) -> (i32, i32, i32) {
    %c0_i32 = arith.constant 0 : i32
    %c0_i32_0 = arith.constant 0 : i32
    return %arg1, %arg0, %c0_i32 : i32, i32, i32
  }
}

</mosaic_0001>

<llo_original>
// kernel: linear_rnn.1
$region0: #{linear_rnn.1}
  #allocation0 [shape = 'u32[]', space=smem, size = 0x4, offset = 0x4, fixed_abs, tag = 'smem constant byte address 0x4 - core index']
  #allocation1 [shape = 'u32[144,128]{1,0:T(1,128)}', space=vmem, size = 0x12000, scoped, tag = 'internal scratch']
  #allocation2 [shape = 'f32[2,128]{1,0:T(2,128)}', space=vmem, size = 0x400, scoped, tag = 'scratch operand']
  #allocation3 [shape = 'f32[8,2,128]{2,1,0:T(2,128)}', space=vmem, size = 0x2000, scoped, tag = 'scratch operand']
  #allocation4 [shape = 'f32[8,2,128]{2,1,0:T(2,128)}', space=vmem, size = 0x2000, scoped, tag = 'scratch operand']
  %s0 = inlined_call_operand.vmem [shape: bf16[8,2,16], index: 0, kind: input, shape index: {}]
  %s1 = inlined_call_operand.vmem [shape: bf16[16,128], index: 1, kind: input, shape index: {}]
  %s2 = inlined_call_operand.vmem [shape: f32[128,128], index: 2, kind: input, shape index: {}]
  %s3 = inlined_call_operand.vmem [shape: f32[128,128], index: 3, kind: input, shape index: {}]
  %s4 = inlined_call_operand.vmem [shape: bf16[128,128], index: 4, kind: input, shape index: {}]
  %s5 = inlined_call_operand.vmem [shape: f32[8,2,128], index: 5, kind: output, shape index: {}]
  %s6 = sld [smem:[#allocation0]]
  $region34: #{linear_rnn.1} parent=0
    _
  %s8 = ssub.s32 1, %s6
  %s9 = scalar_select 0, %s8, %s6
  // Predicated region
  $region2: #{linear_rnn.1} parent=0 // pred_check
    _
  $region3: #{linear_rnn.1} parent=0 // pred_check_branch
    %11 = sbr.rel (0) target = $region5
  $region4: #{linear_rnn.1} parent=0 // pred_region
    _
  $region5: #{linear_rnn.1} parent=0 // pred_fallthru
    _
  // Predicated region
  $region6: #{linear_rnn.1} parent=0 // pred_check
    _
  $region7: #{linear_rnn.1} parent=0 // pred_check_branch
    %13 = sbr.rel (0) target = $region9
  $region8: #{linear_rnn.1} parent=0 // pred_region
    _
  $region9: #{linear_rnn.1} parent=0 // pred_fallthru
    _
  // Predicated region
  $region10: #{linear_rnn.1} parent=0 // pred_check
    _
  $region11: #{linear_rnn.1} parent=0 // pred_check_branch
    %15 = sbr.rel (0) target = $region13
  $region12: #{linear_rnn.1} parent=0 // pred_region
    _
  $region13: #{linear_rnn.1} parent=0 // pred_fallthru
    _
  // Predicated region
  $region14: #{linear_rnn.1} parent=0 // pred_check
    _
  $region15: #{linear_rnn.1} parent=0 // pred_check_branch
    %17 = sbr.rel (0) target = $region17
  $region16: #{linear_rnn.1} parent=0 // pred_region
    _
  $region17: #{linear_rnn.1} parent=0 // pred_fallthru
    _
  // Predicated region
  $region18: #{linear_rnn.1} parent=0 // pred_check
    _
  $region19: #{linear_rnn.1} parent=0 // pred_check_branch
    %19 = sbr.rel (0) target = $region21
  $region20: #{linear_rnn.1} parent=0 // pred_region
    _
  $region21: #{linear_rnn.1} parent=0 // pred_fallthru
    _
  %p21 = scmp.eq.s32.totalorder 0, 0
  // Predicated region
  $region22: #{linear_rnn.1} parent=0 // pred_check
    %p22 = pneg %p21
  $region23: #{linear_rnn.1} parent=0 // pred_check_branch
    %24 = sbr.rel (%p22) target = $region25
  $region24: #{linear_rnn.1} parent=0 // pred_region
    %25 = vst [vmem:[#allocation2] sm:$0x3] 0.0
  $region25: #{linear_rnn.1} parent=0 // pred_fallthru
    _
  %v26 = vld [vmem:[%s2] sm:$0xff]
  %v27 = vld [vmem:[%s2 + $0x8] sm:$0xff]
  %v28 = vld [vmem:[%s2 + $0x10] sm:$0xff]
  %v29 = vld [vmem:[%s2 + $0x18] sm:$0xff]
  %v30 = vld [vmem:[%s2 + $0x20] sm:$0xff]
  %v31 = vld [vmem:[%s2 + $0x28] sm:$0xff]
  %v32 = vld [vmem:[%s2 + $0x30] sm:$0xff]
  %v33 = vld [vmem:[%s2 + $0x38] sm:$0xff]
  %v34 = vld [vmem:[%s2 + $0x40] sm:$0xff]
  %v35 = vld [vmem:[%s2 + $0x48] sm:$0xff]
  %v36 = vld [vmem:[%s2 + $0x50] sm:$0xff]
  %v37 = vld [vmem:[%s2 + $0x58] sm:$0xff]
  %v38 = vld [vmem:[%s2 + $0x60] sm:$0xff]
  %v39 = vld [vmem:[%s2 + $0x68] sm:$0xff]
  %v40 = vld [vmem:[%s2 + $0x70] sm:$0xff]
  %v41 = vld [vmem:[%s2 + $0x78] sm:$0xff]
  %v42 = vld [vmem:[%s3] sm:$0xff]
  %v43 = vld [vmem:[%s3 + $0x8] sm:$0xff]
  %v44 = vld [vmem:[%s3 + $0x10] sm:$0xff]
  %v45 = vld [vmem:[%s3 + $0x18] sm:$0xff]
  %v46 = vld [vmem:[%s3 + $0x20] sm:$0xff]
  %v47 = vld [vmem:[%s3 + $0x28] sm:$0xff]
  %v48 = vld [vmem:[%s3 + $0x30] sm:$0xff]
  %v49 = vld [vmem:[%s3 + $0x38] sm:$0xff]
  %v50 = vld [vmem:[%s3 + $0x40] sm:$0xff]
  %v51 = vld [vmem:[%s3 + $0x48] sm:$0xff]
  %v52 = vld [vmem:[%s3 + $0x50] sm:$0xff]
  %v53 = vld [vmem:[%s3 + $0x58] sm:$0xff]
  %v54 = vld [vmem:[%s3 + $0x60] sm:$0xff]
  %v55 = vld [vmem:[%s3 + $0x68] sm:$0xff]
  %v56 = vld [vmem:[%s3 + $0x70] sm:$0xff]
  %v57 = vld [vmem:[%s3 + $0x78] sm:$0xff]
  %v58 = vld [vmem:[%s0] sm:$0x1]
  %v59 = vld [vmem:[%s0 + $0x1] sm:$0x1]
  %v60 = vld [vmem:[%s0 + $0x2] sm:$0x1]
  %v61 = vld [vmem:[%s0 + $0x3] sm:$0x1]
  %v62 = vld [vmem:[%s0 + $0x4] sm:$0x1]
  %v63 = vld [vmem:[%s0 + $0x5] sm:$0x1]
  %v64 = vld [vmem:[%s0 + $0x6] sm:$0x1]
  %v65 = vld [vmem:[%s0 + $0x7] sm:$0x1]
  %v66 = vld [vmem:[%s1] sm:$0xf]
  %v67 = vld [vmem:[%s1 + $0x4] sm:$0xf]
  %v76 = vcombine.low %v58, %v59
  %v77 = vcombine.low %v60, %v61
  %v78 = vcombine.low %v62, %v63
  %v79 = vcombine.low %v64, %v65
  %v81 = vunpack.c.l.s4 1966171168
  %v82 = vunpack.c.0.s8 %v81
  %v83 = vlaneseq
  %v84 = vshrl.u32 %v83, 7
  %v85 = vsub.s32 %v82, %v84
  %v86 = vrot.slane %v76, %v85
  %v88 = vunpack.c.l.s4 1966171168
  %v89 = vunpack.c.0.s8 %v88
  %v90 = vlaneseq
  %v91 = vshrl.u32 %v90, 7
  %v92 = vsub.s32 %v89, %v91
  %v93 = vrot.slane %v77, %v92
  %v95 = vunpack.c.l.s4 1966171168
  %v96 = vunpack.c.0.s8 %v95
  %v97 = vlaneseq
  %v98 = vshrl.u32 %v97, 7
  %v99 = vsub.s32 %v96, %v98
  %v100 = vrot.slane %v78, %v99
  %v102 = vunpack.c.l.s4 1966171168
  %v103 = vunpack.c.0.s8 %v102
  %v104 = vlaneseq
  %v105 = vshrl.u32 %v104, 7
  %v106 = vsub.s32 %v103, %v105
  %v107 = vrot.slane %v79, %v106
  %v108 = vcombine.low %v86, %v93
  %v109 = vcombine.low %v100, %v107
  %v111 = vunpack.c.l.s4 1966171168
  %v112 = vunpack.c.0.s8 %v111
  %v113 = vlaneseq
  %v114 = vshrl.u32 %v113, 7
  %v115 = vsub.s32 %v112, %v114
  %v116 = vrot.slane %v108, %v115
  %v118 = vunpack.c.l.s4 1966171168
  %v119 = vunpack.c.0.s8 %v118
  %v120 = vlaneseq
  %v121 = vshrl.u32 %v120, 7
  %v122 = vsub.s32 %v119, %v121
  %v123 = vrot.slane %v109, %v122
  %v124 = vcombine.low %v116, %v123
  %v127 = vunpack.c.l.b16 %v66
  %v128 = vunpack.c.l.b16 %v67
  %v129 = vpack.c.b16 %v128, %v127
  %vm131 = vcmask 130048
  %v133 = vsel %vm131, %v124, 0
  %135 = vmatprep.subr.bf16.mxu0 0
  %136 = vmatpush1.bf16.msra.mxu0 0
  %137 = vmatprep.subr.bf16.mxu0 0
  %138 = vmatpush1.bf16.msra.mxu0 0
  %139 = vmatprep.subr.bf16.mxu0 0
  %140 = vmatpush1.bf16.msra.mxu0 0
  %141 = vmatprep.subr.bf16.mxu0 0
  %142 = vmatpush1.bf16.msra.mxu0 0
  %143 = vmatprep.subr.bf16.mxu0 0
  %144 = vmatpush1.bf16.msra.mxu0 0
  %145 = vmatprep.subr.bf16.mxu0 0
  %146 = vmatpush1.bf16.msra.mxu0 0
  %147 = vmatprep.subr.bf16.mxu0 0
  %148 = vmatpush1.bf16.msra.mxu0 0
  %149 = vmatprep.subr.bf16.mxu0 0
  %150 = vmatpush1.bf16.msra.mxu0 %v129
  %151 = vmatprep.subr.bf16.mxu0 0
  %152 = vmatpush2.bf16.msra.mxu0 0
  %153 = vmatprep.subr.bf16.mxu0 0
  %154 = vmatpush2.bf16.msra.mxu0 0
  %155 = vmatprep.subr.bf16.mxu0 0
  %156 = vmatpush2.bf16.msra.mxu0 0
  %157 = vmatprep.subr.bf16.mxu0 0
  %158 = vmatpush2.bf16.msra.mxu0 0
  %159 = vmatprep.subr.bf16.mxu0 0
  %160 = vmatpush2.bf16.msra.mxu0 0
  %161 = vmatprep.subr.bf16.mxu0 0
  %162 = vmatpush2.bf16.msra.mxu0 0
  %163 = vmatprep.subr.bf16.mxu0 0
  %164 = vmatpush2.bf16.msra.mxu0 0
  %165 = vmatprep.subr.bf16.mxu0 0
  %166 = vmatpush2.bf16.msra.mxu0 0
  %167 = vmatprep.mubr.bf16.mxu0 0
  %168 = vmatmul.mubr.bf16.gmra.mxu0 %v133
  %v169 = vpop.f32.mrf.mxu0
  %v170 = vadd.f32 0.0, %v169
  %v171 = vpop.f32.mrf.mxu0
  %v172 = vpop.f32.mrf.mxu0
  %v173 = vadd.f32 0.0, %v172
  %v174 = vpop.f32.mrf.mxu0
  %175 = vdwg.mxu0
  %176 = vmatprep.subr.mxu0 0.0
  %177 = vmatpush1.msra.mxu0 %v41
  %178 = vmatprep.subr.mxu0 0.0
  %179 = vmatpush1.msra.mxu0 %v40
  %180 = vmatprep.subr.mxu0 0.0
  %181 = vmatpush1.msra.mxu0 %v39
  %182 = vmatprep.subr.mxu0 0.0
  %183 = vmatpush1.msra.mxu0 %v38
  %184 = vmatprep.subr.mxu0 0.0
  %185 = vmatpush1.msra.mxu0 %v37
  %186 = vmatprep.subr.mxu0 0.0
  %187 = vmatpush1.msra.mxu0 %v36
  %188 = vmatprep.subr.mxu0 0.0
  %189 = vmatpush1.msra.mxu0 %v35
  %190 = vmatprep.subr.mxu0 0.0
  %191 = vmatpush1.msra.mxu0 %v34
  %192 = vmatprep.subr.mxu0 0.0
  %193 = vmatpush1.msra.mxu0 %v33
  %194 = vmatprep.subr.mxu0 0.0
  %195 = vmatpush1.msra.mxu0 %v32
  %196 = vmatprep.subr.mxu0 0.0
  %197 = vmatpush1.msra.mxu0 %v31
  %198 = vmatprep.subr.mxu0 0.0
  %199 = vmatpush1.msra.mxu0 %v30
  %200 = vmatprep.subr.mxu0 0.0
  %201 = vmatpush1.msra.mxu0 %v29
  %202 = vmatprep.subr.mxu0 0.0
  %203 = vmatpush1.msra.mxu0 %v28
  %204 = vmatprep.subr.mxu0 0.0
  %205 = vmatpush1.msra.mxu0 %v27
  %206 = vmatprep.subr.mxu0 0.0
  %207 = vmatpush1.msra.mxu0 %v26
  %208 = vmatprep.subr.mxu0 0.0
  %209 = vmatpush2.msra.mxu0 0.0
  %210 = vmatprep.subr.mxu0 0.0
  %211 = vmatpush2.msra.mxu0 0.0
  %212 = vmatprep.subr.mxu0 0.0
  %213 = vmatpush2.msra.mxu0 0.0
  %214 = vmatprep.subr.mxu0 0.0
  %215 = vmatpush2.msra.mxu0 0.0
  %216 = vmatprep.subr.mxu0 0.0
  %217 = vmatpush2.msra.mxu0 0.0
  %218 = vmatprep.subr.mxu0 0.0
  %219 = vmatpush2.msra.mxu0 0.0
  %220 = vmatprep.subr.mxu0 0.0
  %221 = vmatpush2.msra.mxu0 0.0
  %222 = vmatprep.subr.mxu0 0.0
  %223 = vmatpush2.msra.mxu0 0.0
  %224 = vmatprep.subr.mxu0 0.0
  %225 = vmatpush2.msra.mxu0 0.0
  %226 = vmatprep.subr.mxu0 0.0
  %227 = vmatpush2.msra.mxu0 0.0
  %228 = vmatprep.subr.mxu0 0.0
  %229 = vmatpush2.msra.mxu0 0.0
  %230 = vmatprep.subr.mxu0 0.0
  %231 = vmatpush2.msra.mxu0 0.0
  %232 = vmatprep.subr.mxu0 0.0
  %233 = vmatpush2.msra.mxu0 0.0
  %234 = vmatprep.subr.mxu0 0.0
  %235 = vmatpush2.msra.mxu0 0.0
  %236 = vmatprep.subr.mxu0 0.0
  %237 = vmatpush2.msra.mxu0 0.0
  %238 = vmatprep.subr.mxu0 0.0
  %239 = vmatpush2.msra.mxu0 0.0
  %240 = vmatprep.mubr.f32.mxu0 0.0
  %241 = vmatmul.mubr.f32.gmra.mxu0 %v170
  %v242 = vpop.f32.mrf.mxu0
  %v243 = vadd.f32 0.0, %v242
  %v244 = vpop.f32.mrf.mxu0
  %245 = vmatprep.mubr.f32.mxu0 0.0
  %246 = vmatmul.mubr.f32.gmra.mxu0 %v173
  %v247 = vpop.f32.mrf.mxu0
  %v248 = vadd.f32 0.0, %v247
  %v249 = vpop.f32.mrf.mxu0
  %250 = vdwg.mxu0
  %v253 = vcombine.high %v170, %v170
  %v255 = vunpack.c.l.s4 1983009808
  %v256 = vunpack.c.0.s8 %v255
  %v257 = vlaneseq
  %v258 = vshrl.u32 %v257, 7
  %v259 = vsub.s32 %v256, %v258
  %v260 = vrot.slane %v170, %v259
  %v262 = vunpack.c.l.s4 1983009808
  %v263 = vunpack.c.0.s8 %v262
  %v264 = vlaneseq
  %v265 = vshrl.u32 %v264, 7
  %v266 = vsub.s32 %v263, %v265
  %v267 = vrot.slane %v253, %v266
  %v268 = vcombine.high %v260, %v260
  %v269 = vcombine.high %v267, %v267
  %v270 = vcombine.high %v173, %v173
  %v272 = vunpack.c.l.s4 1983009808
  %v273 = vunpack.c.0.s8 %v272
  %v274 = vlaneseq
  %v275 = vshrl.u32 %v274, 7
  %v276 = vsub.s32 %v273, %v275
  %v277 = vrot.slane %v173, %v276
  %v279 = vunpack.c.l.s4 1983009808
  %v280 = vunpack.c.0.s8 %v279
  %v281 = vlaneseq
  %v282 = vshrl.u32 %v281, 7
  %v283 = vsub.s32 %v280, %v282
  %v284 = vrot.slane %v270, %v283
  %v285 = vcombine.high %v277, %v277
  %v286 = vcombine.high %v284, %v284
  %295 = vst [vmem:[#allocation3] sm:$0x3] %v260
  %296 = vst [vmem:[#allocation3 + $0x2] sm:$0x3] %v268
  %297 = vst [vmem:[#allocation3 + $0x4] sm:$0x3] %v267
  %298 = vst [vmem:[#allocation3 + $0x6] sm:$0x3] %v269
  %299 = vst [vmem:[#allocation3 + $0x8] sm:$0x3] %v277
  %300 = vst [vmem:[#allocation3 + $0xa] sm:$0x3] %v285
  %301 = vst [vmem:[#allocation3 + $0xc] sm:$0x3] %v284
  %302 = vst [vmem:[#allocation3 + $0xe] sm:$0x3] %v286
  %v305 = vcombine.high %v243, %v243
  %v307 = vunpack.c.l.s4 1983009808
  %v308 = vunpack.c.0.s8 %v307
  %v309 = vlaneseq
  %v310 = vshrl.u32 %v309, 7
  %v311 = vsub.s32 %v308, %v310
  %v312 = vrot.slane %v243, %v311
  %v314 = vunpack.c.l.s4 1983009808
  %v315 = vunpack.c.0.s8 %v314
  %v316 = vlaneseq
  %v317 = vshrl.u32 %v316, 7
  %v318 = vsub.s32 %v315, %v317
  %v319 = vrot.slane %v305, %v318
  %v320 = vcombine.high %v312, %v312
  %v321 = vcombine.high %v319, %v319
  %v322 = vcombine.high %v248, %v248
  %v324 = vunpack.c.l.s4 1983009808
  %v325 = vunpack.c.0.s8 %v324
  %v326 = vlaneseq
  %v327 = vshrl.u32 %v326, 7
  %v328 = vsub.s32 %v325, %v327
  %v329 = vrot.slane %v248, %v328
  %v331 = vunpack.c.l.s4 1983009808
  %v332 = vunpack.c.0.s8 %v331
  %v333 = vlaneseq
  %v334 = vshrl.u32 %v333, 7
  %v335 = vsub.s32 %v332, %v334
  %v336 = vrot.slane %v322, %v335
  %v337 = vcombine.high %v329, %v329
  %v338 = vcombine.high %v336, %v336
  %347 = vst [vmem:[#allocation4] sm:$0x3] %v312
  %348 = vst [vmem:[#allocation4 + $0x2] sm:$0x3] %v320
  %349 = vst [vmem:[#allocation4 + $0x4] sm:$0x3] %v319
  %350 = vst [vmem:[#allocation4 + $0x6] sm:$0x3] %v321
  %351 = vst [vmem:[#allocation4 + $0x8] sm:$0x3] %v329
  %352 = vst [vmem:[#allocation4 + $0xa] sm:$0x3] %v337
  %353 = vst [vmem:[#allocation4 + $0xc] sm:$0x3] %v336
  %354 = vst [vmem:[#allocation4 + $0xe] sm:$0x3] %v338
  %v355 = vld [vmem:[#allocation2] sm:$0x3]
  %356 = vmatprep.subr.mxu0 0.0
  %357 = vmatpush1.msra.mxu0 %v41
  %358 = vmatprep.subr.mxu0 0.0
  %359 = vmatpush1.msra.mxu0 %v40
  %360 = vmatprep.subr.mxu0 0.0
  %361 = vmatpush1.msra.mxu0 %v39
  %362 = vmatprep.subr.mxu0 0.0
  %363 = vmatpush1.msra.mxu0 %v38
  %364 = vmatprep.subr.mxu0 0.0
  %365 = vmatpush1.msra.mxu0 %v37
  %366 = vmatprep.subr.mxu0 0.0
  %367 = vmatpush1.msra.mxu0 %v36
  %368 = vmatprep.subr.mxu0 0.0
  %369 = vmatpush1.msra.mxu0 %v35
  %370 = vmatprep.subr.mxu0 0.0
  %371 = vmatpush1.msra.mxu0 %v34
  %372 = vmatprep.subr.mxu0 0.0
  %373 = vmatpush1.msra.mxu0 %v33
  %374 = vmatprep.subr.mxu0 0.0
  %375 = vmatpush1.msra.mxu0 %v32
  %376 = vmatprep.subr.mxu0 0.0
  %377 = vmatpush1.msra.mxu0 %v31
  %378 = vmatprep.subr.mxu0 0.0
  %379 = vmatpush1.msra.mxu0 %v30
  %380 = vmatprep.subr.mxu0 0.0
  %381 = vmatpush1.msra.mxu0 %v29
  %382 = vmatprep.subr.mxu0 0.0
  %383 = vmatpush1.msra.mxu0 %v28
  %384 = vmatprep.subr.mxu0 0.0
  %385 = vmatpush1.msra.mxu0 %v27
  %386 = vmatprep.subr.mxu0 0.0
  %387 = vmatpush1.msra.mxu0 %v26
  %388 = vmatprep.subr.mxu0 0.0
  %389 = vmatpush2.msra.mxu0 0.0
  %390 = vmatprep.subr.mxu0 0.0
  %391 = vmatpush2.msra.mxu0 0.0
  %392 = vmatprep.subr.mxu0 0.0
  %393 = vmatpush2.msra.mxu0 0.0
  %394 = vmatprep.subr.mxu0 0.0
  %395 = vmatpush2.msra.mxu0 0.0
  %396 = vmatprep.subr.mxu0 0.0
  %397 = vmatpush2.msra.mxu0 0.0
  %398 = vmatprep.subr.mxu0 0.0
  %399 = vmatpush2.msra.mxu0 0.0
  %400 = vmatprep.subr.mxu0 0.0
  %401 = vmatpush2.msra.mxu0 0.0
  %402 = vmatprep.subr.mxu0 0.0
  %403 = vmatpush2.msra.mxu0 0.0
  %404 = vmatprep.subr.mxu0 0.0
  %405 = vmatpush2.msra.mxu0 0.0
  %406 = vmatprep.subr.mxu0 0.0
  %407 = vmatpush2.msra.mxu0 0.0
  %408 = vmatprep.subr.mxu0 0.0
  %409 = vmatpush2.msra.mxu0 0.0
  %410 = vmatprep.subr.mxu0 0.0
  %411 = vmatpush2.msra.mxu0 0.0
  %412 = vmatprep.subr.mxu0 0.0
  %413 = vmatpush2.msra.mxu0 0.0
  %414 = vmatprep.subr.mxu0 0.0
  %415 = vmatpush2.msra.mxu0 0.0
  %416 = vmatprep.subr.mxu0 0.0
  %417 = vmatpush2.msra.mxu0 0.0
  %418 = vmatprep.subr.mxu0 0.0
  %419 = vmatpush2.msra.mxu0 0.0
  %420 = vmatprep.mubr.f32.mxu0 0.0
  %421 = vmatmul.mubr.f32.gmra.mxu0 %v355
  %v422 = vpop.f32.mrf.mxu0
  %v423 = vadd.f32 0.0, %v422
  %v424 = vpop.f32.mrf.mxu0
  %425 = vdwg.mxu0
  %426 = vmatprep.subr.mxu0 0.0
  %427 = vmatpush1.msra.mxu0 %v57
  %428 = vmatprep.subr.mxu0 0.0
  %429 = vmatpush1.msra.mxu0 %v56
  %430 = vmatprep.subr.mxu0 0.0
  %431 = vmatpush1.msra.mxu0 %v55
  %432 = vmatprep.subr.mxu0 0.0
  %433 = vmatpush1.msra.mxu0 %v54
  %434 = vmatprep.subr.mxu0 0.0
  %435 = vmatpush1.msra.mxu0 %v53
  %436 = vmatprep.subr.mxu0 0.0
  %437 = vmatpush1.msra.mxu0 %v52
  %438 = vmatprep.subr.mxu0 0.0
  %439 = vmatpush1.msra.mxu0 %v51
  %440 = vmatprep.subr.mxu0 0.0
  %441 = vmatpush1.msra.mxu0 %v50
  %442 = vmatprep.subr.mxu0 0.0
  %443 = vmatpush1.msra.mxu0 %v49
  %444 = vmatprep.subr.mxu0 0.0
  %445 = vmatpush1.msra.mxu0 %v48
  %446 = vmatprep.subr.mxu0 0.0
  %447 = vmatpush1.msra.mxu0 %v47
  %448 = vmatprep.subr.mxu0 0.0
  %449 = vmatpush1.msra.mxu0 %v46
  %450 = vmatprep.subr.mxu0 0.0
  %451 = vmatpush1.msra.mxu0 %v45
  %452 = vmatprep.subr.mxu0 0.0
  %453 = vmatpush1.msra.mxu0 %v44
  %454 = vmatprep.subr.mxu0 0.0
  %455 = vmatpush1.msra.mxu0 %v43
  %456 = vmatprep.subr.mxu0 0.0
  %457 = vmatpush1.msra.mxu0 %v42
  %458 = vmatprep.subr.mxu0 0.0
  %459 = vmatpush2.msra.mxu0 0.0
  %460 = vmatprep.subr.mxu0 0.0
  %461 = vmatpush2.msra.mxu0 0.0
  %462 = vmatprep.subr.mxu0 0.0
  %463 = vmatpush2.msra.mxu0 0.0
  %464 = vmatprep.subr.mxu0 0.0
  %465 = vmatpush2.msra.mxu0 0.0
  %466 = vmatprep.subr.mxu0 0.0
  %467 = vmatpush2.msra.mxu0 0.0
  %468 = vmatprep.subr.mxu0 0.0
  %469 = vmatpush2.msra.mxu0 0.0
  %470 = vmatprep.subr.mxu0 0.0
  %471 = vmatpush2.msra.mxu0 0.0
  %472 = vmatprep.subr.mxu0 0.0
  %473 = vmatpush2.msra.mxu0 0.0
  %474 = vmatprep.subr.mxu0 0.0
  %475 = vmatpush2.msra.mxu0 0.0
  %476 = vmatprep.subr.mxu0 0.0
  %477 = vmatpush2.msra.mxu0 0.0
  %478 = vmatprep.subr.mxu0 0.0
  %479 = vmatpush2.msra.mxu0 0.0
  %480 = vmatprep.subr.mxu0 0.0
  %481 = vmatpush2.msra.mxu0 0.0
  %482 = vmatprep.subr.mxu0 0.0
  %483 = vmatpush2.msra.mxu0 0.0
  %484 = vmatprep.subr.mxu0 0.0
  %485 = vmatpush2.msra.mxu0 0.0
  %486 = vmatprep.subr.mxu0 0.0
  %487 = vmatpush2.msra.mxu0 0.0
  %488 = vmatprep.subr.mxu0 0.0
  %489 = vmatpush2.msra.mxu0 0.0
  %490 = vmatprep.mubr.f32.mxu0 0.0
  %491 = vmatmul.mubr.f32.gmra.mxu0 %v355
  %v492 = vpop.f32.mrf.mxu0
  %v493 = vadd.f32 0.0, %v492
  %v494 = vpop.f32.mrf.mxu0
  %495 = vdwg.mxu0
  %v496 = vld [vmem:[#allocation3] sm:$0x3]
  %v497 = vadd.f32 %v496, %v423
  %s498 = scalar_lea.vmem [#allocation3], 2
  %v499 = vld [vmem:[%s498] sm:$0x3]
  %v500 = vld [vmem:[#allocation4] sm:$0x3]
  %v501 = vadd.f32 %v499, %v500
  %v502 = vadd.f32 %v501, %v493
  %503 = vst [vmem:[#allocation3] sm:$0x3] %v497
  %504 = vst [vmem:[%s498] sm:$0x3] %v502
  %505 = vmatprep.subr.mxu0 0.0
  %506 = vmatpush1.msra.mxu0 %v41
  %507 = vmatprep.subr.mxu0 0.0
  %508 = vmatpush1.msra.mxu0 %v40
  %509 = vmatprep.subr.mxu0 0.0
  %510 = vmatpush1.msra.mxu0 %v39
  %511 = vmatprep.subr.mxu0 0.0
  %512 = vmatpush1.msra.mxu0 %v38
  %513 = vmatprep.subr.mxu0 0.0
  %514 = vmatpush1.msra.mxu0 %v37
  %515 = vmatprep.subr.mxu0 0.0
  %516 = vmatpush1.msra.mxu0 %v36
  %517 = vmatprep.subr.mxu0 0.0
  %518 = vmatpush1.msra.mxu0 %v35
  %519 = vmatprep.subr.mxu0 0.0
  %520 = vmatpush1.msra.mxu0 %v34
  %521 = vmatprep.subr.mxu0 0.0
  %522 = vmatpush1.msra.mxu0 %v33
  %523 = vmatprep.subr.mxu0 0.0
  %524 = vmatpush1.msra.mxu0 %v32
  %525 = vmatprep.subr.mxu0 0.0
  %526 = vmatpush1.msra.mxu0 %v31
  %527 = vmatprep.subr.mxu0 0.0
  %528 = vmatpush1.msra.mxu0 %v30
  %529 = vmatprep.subr.mxu0 0.0
  %530 = vmatpush1.msra.mxu0 %v29
  %531 = vmatprep.subr.mxu0 0.0
  %532 = vmatpush1.msra.mxu0 %v28
  %533 = vmatprep.subr.mxu0 0.0
  %534 = vmatpush1.msra.mxu0 %v27
  %535 = vmatprep.subr.mxu0 0.0
  %536 = vmatpush1.msra.mxu0 %v26
  %537 = vmatprep.subr.mxu0 0.0
  %538 = vmatpush2.msra.mxu0 0.0
  %539 = vmatprep.subr.mxu0 0.0
  %540 = vmatpush2.msra.mxu0 0.0
  %541 = vmatprep.subr.mxu0 0.0
  %542 = vmatpush2.msra.mxu0 0.0
  %543 = vmatprep.subr.mxu0 0.0
  %544 = vmatpush2.msra.mxu0 0.0
  %545 = vmatprep.subr.mxu0 0.0
  %546 = vmatpush2.msra.mxu0 0.0
  %547 = vmatprep.subr.mxu0 0.0
  %548 = vmatpush2.msra.mxu0 0.0
  %549 = vmatprep.subr.mxu0 0.0
  %550 = vmatpush2.msra.mxu0 0.0
  %551 = vmatprep.subr.mxu0 0.0
  %552 = vmatpush2.msra.mxu0 0.0
  %553 = vmatprep.subr.mxu0 0.0
  %554 = vmatpush2.msra.mxu0 0.0
  %555 = vmatprep.subr.mxu0 0.0
  %556 = vmatpush2.msra.mxu0 0.0
  %557 = vmatprep.subr.mxu0 0.0
  %558 = vmatpush2.msra.mxu0 0.0
  %559 = vmatprep.subr.mxu0 0.0
  %560 = vmatpush2.msra.mxu0 0.0
  %561 = vmatprep.subr.mxu0 0.0
  %562 = vmatpush2.msra.mxu0 0.0
  %563 = vmatprep.subr.mxu0 0.0
  %564 = vmatpush2.msra.mxu0 0.0
  %565 = vmatprep.subr.mxu0 0.0
  %566 = vmatpush2.msra.mxu0 0.0
  %567 = vmatprep.subr.mxu0 0.0
  %568 = vmatpush2.msra.mxu0 0.0
  %569 = vmatprep.mubr.f32.mxu0 0.0
  %570 = vmatmul.mubr.f32.gmra.mxu0 %v502
  %v571 = vpop.f32.mrf.mxu0
  %v572 = vadd.f32 0.0, %v571
  %v573 = vpop.f32.mrf.mxu0
  %574 = vdwg.mxu0
  %575 = vmatprep.subr.mxu0 0.0
  %576 = vmatpush1.msra.mxu0 %v57
  %577 = vmatprep.subr.mxu0 0.0
  %578 = vmatpush1.msra.mxu0 %v56
  %579 = vmatprep.subr.mxu0 0.0
  %580 = vmatpush1.msra.mxu0 %v55
  %581 = vmatprep.subr.mxu0 0.0
  %582 = vmatpush1.msra.mxu0 %v54
  %583 = vmatprep.subr.mxu0 0.0
  %584 = vmatpush1.msra.mxu0 %v53
  %585 = vmatprep.subr.mxu0 0.0
  %586 = vmatpush1.msra.mxu0 %v52
  %587 = vmatprep.subr.mxu0 0.0
  %588 = vmatpush1.msra.mxu0 %v51
  %589 = vmatprep.subr.mxu0 0.0
  %590 = vmatpush1.msra.mxu0 %v50
  %591 = vmatprep.subr.mxu0 0.0
  %592 = vmatpush1.msra.mxu0 %v49
  %593 = vmatprep.subr.mxu0 0.0
  %594 = vmatpush1.msra.mxu0 %v48
  %595 = vmatprep.subr.mxu0 0.0
  %596 = vmatpush1.msra.mxu0 %v47
  %597 = vmatprep.subr.mxu0 0.0
  %598 = vmatpush1.msra.mxu0 %v46
  %599 = vmatprep.subr.mxu0 0.0
  %600 = vmatpush1.msra.mxu0 %v45
  %601 = vmatprep.subr.mxu0 0.0
  %602 = vmatpush1.msra.mxu0 %v44
  %603 = vmatprep.subr.mxu0 0.0
  %604 = vmatpush1.msra.mxu0 %v43
  %605 = vmatprep.subr.mxu0 0.0
  %606 = vmatpush1.msra.mxu0 %v42
  %607 = vmatprep.subr.mxu0 0.0
  %608 = vmatpush2.msra.mxu0 0.0
  %609 = vmatprep.subr.mxu0 0.0
  %610 = vmatpush2.msra.mxu0 0.0
  %611 = vmatprep.subr.mxu0 0.0
  %612 = vmatpush2.msra.mxu0 0.0
  %613 = vmatprep.subr.mxu0 0.0
  %614 = vmatpush2.msra.mxu0 0.0
  %615 = vmatprep.subr.mxu0 0.0
  %616 = vmatpush2.msra.mxu0 0.0
  %617 = vmatprep.subr.mxu0 0.0
  %618 = vmatpush2.msra.mxu0 0.0
  %619 = vmatprep.subr.mxu0 0.0
  %620 = vmatpush2.msra.mxu0 0.0
  %621 = vmatprep.subr.mxu0 0.0
  %622 = vmatpush2.msra.mxu0 0.0
  %623 = vmatprep.subr.mxu0 0.0
  %624 = vmatpush2.msra.mxu0 0.0
  %625 = vmatprep.subr.mxu0 0.0
  %626 = vmatpush2.msra.mxu0 0.0
  %627 = vmatprep.subr.mxu0 0.0
  %628 = vmatpush2.msra.mxu0 0.0
  %629 = vmatprep.subr.mxu0 0.0
  %630 = vmatpush2.msra.mxu0 0.0
  %631 = vmatprep.subr.mxu0 0.0
  %632 = vmatpush2.msra.mxu0 0.0
  %633 = vmatprep.subr.mxu0 0.0
  %634 = vmatpush2.msra.mxu0 0.0
  %635 = vmatprep.subr.mxu0 0.0
  %636 = vmatpush2.msra.mxu0 0.0
  %637 = vmatprep.subr.mxu0 0.0
  %638 = vmatpush2.msra.mxu0 0.0
  %639 = vmatprep.mubr.f32.mxu0 0.0
  %640 = vmatmul.mubr.f32.gmra.mxu0 %v502
  %v641 = vpop.f32.mrf.mxu0
  %v642 = vadd.f32 0.0, %v641
  %v643 = vpop.f32.mrf.mxu0
  %644 = vdwg.mxu0
  %s645 = scalar_lea.vmem [#allocation3], 4
  %v646 = vld [vmem:[%s645] sm:$0x3]
  %v647 = vadd.f32 %v646, %v572
  %s648 = scalar_lea.vmem [#allocation3], 6
  %v649 = vld [vmem:[%s648] sm:$0x3]
  %s650 = scalar_lea.vmem [#allocation4], 4
  %v651 = vld [vmem:[%s650] sm:$0x3]
  %v652 = vadd.f32 %v649, %v651
  %v653 = vadd.f32 %v652, %v642
  %654 = vst [vmem:[%s645] sm:$0x3] %v647
  %655 = vst [vmem:[%s648] sm:$0x3] %v653
  %656 = vmatprep.subr.mxu0 0.0
  %657 = vmatpush1.msra.mxu0 %v41
  %658 = vmatprep.subr.mxu0 0.0
  %659 = vmatpush1.msra.mxu0 %v40
  %660 = vmatprep.subr.mxu0 0.0
  %661 = vmatpush1.msra.mxu0 %v39
  %662 = vmatprep.subr.mxu0 0.0
  %663 = vmatpush1.msra.mxu0 %v38
  %664 = vmatprep.subr.mxu0 0.0
  %665 = vmatpush1.msra.mxu0 %v37
  %666 = vmatprep.subr.mxu0 0.0
  %667 = vmatpush1.msra.mxu0 %v36
  %668 = vmatprep.subr.mxu0 0.0
  %669 = vmatpush1.msra.mxu0 %v35
  %670 = vmatprep.subr.mxu0 0.0
  %671 = vmatpush1.msra.mxu0 %v34
  %672 = vmatprep.subr.mxu0 0.0
  %673 = vmatpush1.msra.mxu0 %v33
  %674 = vmatprep.subr.mxu0 0.0
  %675 = vmatpush1.msra.mxu0 %v32
  %676 = vmatprep.subr.mxu0 0.0
  %677 = vmatpush1.msra.mxu0 %v31
  %678 = vmatprep.subr.mxu0 0.0
  %679 = vmatpush1.msra.mxu0 %v30
  %680 = vmatprep.subr.mxu0 0.0
  %681 = vmatpush1.msra.mxu0 %v29
  %682 = vmatprep.subr.mxu0 0.0
  %683 = vmatpush1.msra.mxu0 %v28
  %684 = vmatprep.subr.mxu0 0.0
  %685 = vmatpush1.msra.mxu0 %v27
  %686 = vmatprep.subr.mxu0 0.0
  %687 = vmatpush1.msra.mxu0 %v26
  %688 = vmatprep.subr.mxu0 0.0
  %689 = vmatpush2.msra.mxu0 0.0
  %690 = vmatprep.subr.mxu0 0.0
  %691 = vmatpush2.msra.mxu0 0.0
  %692 = vmatprep.subr.mxu0 0.0
  %693 = vmatpush2.msra.mxu0 0.0
  %694 = vmatprep.subr.mxu0 0.0
  %695 = vmatpush2.msra.mxu0 0.0
  %696 = vmatprep.subr.mxu0 0.0
  %697 = vmatpush2.msra.mxu0 0.0
  %698 = vmatprep.subr.mxu0 0.0
  %699 = vmatpush2.msra.mxu0 0.0
  %700 = vmatprep.subr.mxu0 0.0
  %701 = vmatpush2.msra.mxu0 0.0
  %702 = vmatprep.subr.mxu0 0.0
  %703 = vmatpush2.msra.mxu0 0.0
  %704 = vmatprep.subr.mxu0 0.0
  %705 = vmatpush2.msra.mxu0 0.0
  %706 = vmatprep.subr.mxu0 0.0
  %707 = vmatpush2.msra.mxu0 0.0
  %708 = vmatprep.subr.mxu0 0.0
  %709 = vmatpush2.msra.mxu0 0.0
  %710 = vmatprep.subr.mxu0 0.0
  %711 = vmatpush2.msra.mxu0 0.0
  %712 = vmatprep.subr.mxu0 0.0
  %713 = vmatpush2.msra.mxu0 0.0
  %714 = vmatprep.subr.mxu0 0.0
  %715 = vmatpush2.msra.mxu0 0.0
  %716 = vmatprep.subr.mxu0 0.0
  %717 = vmatpush2.msra.mxu0 0.0
  %718 = vmatprep.subr.mxu0 0.0
  %719 = vmatpush2.msra.mxu0 0.0
  %720 = vmatprep.mubr.f32.mxu0 0.0
  %721 = vmatmul.mubr.f32.gmra.mxu0 %v653
  %v722 = vpop.f32.mrf.mxu0
  %v723 = vadd.f32 0.0, %v722
  %v724 = vpop.f32.mrf.mxu0
  %725 = vdwg.mxu0
  %726 = vmatprep.subr.mxu0 0.0
  %727 = vmatpush1.msra.mxu0 %v57
  %728 = vmatprep.subr.mxu0 0.0
  %729 = vmatpush1.msra.mxu0 %v56
  %730 = vmatprep.subr.mxu0 0.0
  %731 = vmatpush1.msra.mxu0 %v55
  %732 = vmatprep.subr.mxu0 0.0
  %733 = vmatpush1.msra.mxu0 %v54
  %734 = vmatprep.subr.mxu0 0.0
  %735 = vmatpush1.msra.mxu0 %v53
  %736 = vmatprep.subr.mxu0 0.0
  %737 = vmatpush1.msra.mxu0 %v52
  %738 = vmatprep.subr.mxu0 0.0
  %739 = vmatpush1.msra.mxu0 %v51
  %740 = vmatprep.subr.mxu0 0.0
  %741 = vmatpush1.msra.mxu0 %v50
  %742 = vmatprep.subr.mxu0 0.0
  %743 = vmatpush1.msra.mxu0 %v49
  %744 = vmatprep.subr.mxu0 0.0
  %745 = vmatpush1.msra.mxu0 %v48
  %746 = vmatprep.subr.mxu0 0.0
  %747 = vmatpush1.msra.mxu0 %v47
  %748 = vmatprep.subr.mxu0 0.0
  %749 = vmatpush1.msra.mxu0 %v46
  %750 = vmatprep.subr.mxu0 0.0
  %751 = vmatpush1.msra.mxu0 %v45
  %752 = vmatprep.subr.mxu0 0.0
  %753 = vmatpush1.msra.mxu0 %v44
  %754 = vmatprep.subr.mxu0 0.0
  %755 = vmatpush1.msra.mxu0 %v43
  %756 = vmatprep.subr.mxu0 0.0
  %757 = vmatpush1.msra.mxu0 %v42
  %758 = vmatprep.subr.mxu0 0.0
  %759 = vmatpush2.msra.mxu0 0.0
  %760 = vmatprep.subr.mxu0 0.0
  %761 = vmatpush2.msra.mxu0 0.0
  %762 = vmatprep.subr.mxu0 0.0
  %763 = vmatpush2.msra.mxu0 0.0
  %764 = vmatprep.subr.mxu0 0.0
  %765 = vmatpush2.msra.mxu0 0.0
  %766 = vmatprep.subr.mxu0 0.0
  %767 = vmatpush2.msra.mxu0 0.0
  %768 = vmatprep.subr.mxu0 0.0
  %769 = vmatpush2.msra.mxu0 0.0
  %770 = vmatprep.subr.mxu0 0.0
  %771 = vmatpush2.msra.mxu0 0.0
  %772 = vmatprep.subr.mxu0 0.0
  %773 = vmatpush2.msra.mxu0 0.0
  %774 = vmatprep.subr.mxu0 0.0
  %775 = vmatpush2.msra.mxu0 0.0
  %776 = vmatprep.subr.mxu0 0.0
  %777 = vmatpush2.msra.mxu0 0.0
  %778 = vmatprep.subr.mxu0 0.0
  %779 = vmatpush2.msra.mxu0 0.0
  %780 = vmatprep.subr.mxu0 0.0
  %781 = vmatpush2.msra.mxu0 0.0
  %782 = vmatprep.subr.mxu0 0.0
  %783 = vmatpush2.msra.mxu0 0.0
  %784 = vmatprep.subr.mxu0 0.0
  %785 = vmatpush2.msra.mxu0 0.0
  %786 = vmatprep.subr.mxu0 0.0
  %787 = vmatpush2.msra.mxu0 0.0
  %788 = vmatprep.subr.mxu0 0.0
  %789 = vmatpush2.msra.mxu0 0.0
  %790 = vmatprep.mubr.f32.mxu0 0.0
  %791 = vmatmul.mubr.f32.gmra.mxu0 %v653
  %v792 = vpop.f32.mrf.mxu0
  %v793 = vadd.f32 0.0, %v792
  %v794 = vpop.f32.mrf.mxu0
  %795 = vdwg.mxu0
  %s796 = scalar_lea.vmem [#allocation3], 8
  %v797 = vld [vmem:[%s796] sm:$0x3]
  %v798 = vadd.f32 %v797, %v723
  %s799 = scalar_lea.vmem [#allocation3], 10
  %v800 = vld [vmem:[%s799] sm:$0x3]
  %s801 = scalar_lea.vmem [#allocation4], 8
  %v802 = vld [vmem:[%s801] sm:$0x3]
  %v803 = vadd.f32 %v800, %v802
  %v804 = vadd.f32 %v803, %v793
  %805 = vst [vmem:[%s796] sm:$0x3] %v798
  %806 = vst [vmem:[%s799] sm:$0x3] %v804
  %807 = vmatprep.subr.mxu0 0.0
  %808 = vmatpush1.msra.mxu0 %v41
  %809 = vmatprep.subr.mxu0 0.0
  %810 = vmatpush1.msra.mxu0 %v40
  %811 = vmatprep.subr.mxu0 0.0
  %812 = vmatpush1.msra.mxu0 %v39
  %813 = vmatprep.subr.mxu0 0.0
  %814 = vmatpush1.msra.mxu0 %v38
  %815 = vmatprep.subr.mxu0 0.0
  %816 = vmatpush1.msra.mxu0 %v37
  %817 = vmatprep.subr.mxu0 0.0
  %818 = vmatpush1.msra.mxu0 %v36
  %819 = vmatprep.subr.mxu0 0.0
  %820 = vmatpush1.msra.mxu0 %v35
  %821 = vmatprep.subr.mxu0 0.0
  %822 = vmatpush1.msra.mxu0 %v34
  %823 = vmatprep.subr.mxu0 0.0
  %824 = vmatpush1.msra.mxu0 %v33
  %825 = vmatprep.subr.mxu0 0.0
  %826 = vmatpush1.msra.mxu0 %v32
  %827 = vmatprep.subr.mxu0 0.0
  %828 = vmatpush1.msra.mxu0 %v31
  %829 = vmatprep.subr.mxu0 0.0
  %830 = vmatpush1.msra.mxu0 %v30
  %831 = vmatprep.subr.mxu0 0.0
  %832 = vmatpush1.msra.mxu0 %v29
  %833 = vmatprep.subr.mxu0 0.0
  %834 = vmatpush1.msra.mxu0 %v28
  %835 = vmatprep.subr.mxu0 0.0
  %836 = vmatpush1.msra.mxu0 %v27
  %837 = vmatprep.subr.mxu0 0.0
  %838 = vmatpush1.msra.mxu0 %v26
  %839 = vmatprep.subr.mxu0 0.0
  %840 = vmatpush2.msra.mxu0 0.0
  %841 = vmatprep.subr.mxu0 0.0
  %842 = vmatpush2.msra.mxu0 0.0
  %843 = vmatprep.subr.mxu0 0.0
  %844 = vmatpush2.msra.mxu0 0.0
  %845 = vmatprep.subr.mxu0 0.0
  %846 = vmatpush2.msra.mxu0 0.0
  %847 = vmatprep.subr.mxu0 0.0
  %848 = vmatpush2.msra.mxu0 0.0
  %849 = vmatprep.subr.mxu0 0.0
  %850 = vmatpush2.msra.mxu0 0.0
  %851 = vmatprep.subr.mxu0 0.0
  %852 = vmatpush2.msra.mxu0 0.0
  %853 = vmatprep.subr.mxu0 0.0
  %854 = vmatpush2.msra.mxu0 0.0
  %855 = vmatprep.subr.mxu0 0.0
  %856 = vmatpush2.msra.mxu0 0.0
  %857 = vmatprep.subr.mxu0 0.0
  %858 = vmatpush2.msra.mxu0 0.0
  %859 = vmatprep.subr.mxu0 0.0
  %860 = vmatpush2.msra.mxu0 0.0
  %861 = vmatprep.subr.mxu0 0.0
  %862 = vmatpush2.msra.mxu0 0.0
  %863 = vmatprep.subr.mxu0 0.0
  %864 = vmatpush2.msra.mxu0 0.0
  %865 = vmatprep.subr.mxu0 0.0
  %866 = vmatpush2.msra.mxu0 0.0
  %867 = vmatprep.subr.mxu0 0.0
  %868 = vmatpush2.msra.mxu0 0.0
  %869 = vmatprep.subr.mxu0 0.0
  %870 = vmatpush2.msra.mxu0 0.0
  %871 = vmatprep.mubr.f32.mxu0 0.0
  %872 = vmatmul.mubr.f32.gmra.mxu0 %v804
  %v873 = vpop.f32.mrf.mxu0
  %v874 = vadd.f32 0.0, %v873
  %v875 = vpop.f32.mrf.mxu0
  %876 = vdwg.mxu0
  %877 = vmatprep.subr.mxu0 0.0
  %878 = vmatpush1.msra.mxu0 %v57
  %879 = vmatprep.subr.mxu0 0.0
  %880 = vmatpush1.msra.mxu0 %v56
  %881 = vmatprep.subr.mxu0 0.0
  %882 = vmatpush1.msra.mxu0 %v55
  %883 = vmatprep.subr.mxu0 0.0
  %884 = vmatpush1.msra.mxu0 %v54
  %885 = vmatprep.subr.mxu0 0.0
  %886 = vmatpush1.msra.mxu0 %v53
  %887 = vmatprep.subr.mxu0 0.0
  %888 = vmatpush1.msra.mxu0 %v52
  %889 = vmatprep.subr.mxu0 0.0
  %890 = vmatpush1.msra.mxu0 %v51
  %891 = vmatprep.subr.mxu0 0.0
  %892 = vmatpush1.msra.mxu0 %v50
  %893 = vmatprep.subr.mxu0 0.0
  %894 = vmatpush1.msra.mxu0 %v49
  %895 = vmatprep.subr.mxu0 0.0
  %896 = vmatpush1.msra.mxu0 %v48
  %897 = vmatprep.subr.mxu0 0.0
  %898 = vmatpush1.msra.mxu0 %v47
  %899 = vmatprep.subr.mxu0 0.0
  %900 = vmatpush1.msra.mxu0 %v46
  %901 = vmatprep.subr.mxu0 0.0
  %902 = vmatpush1.msra.mxu0 %v45
  %903 = vmatprep.subr.mxu0 0.0
  %904 = vmatpush1.msra.mxu0 %v44
  %905 = vmatprep.subr.mxu0 0.0
  %906 = vmatpush1.msra.mxu0 %v43
  %907 = vmatprep.subr.mxu0 0.0
  %908 = vmatpush1.msra.mxu0 %v42
  %909 = vmatprep.subr.mxu0 0.0
  %910 = vmatpush2.msra.mxu0 0.0
  %911 = vmatprep.subr.mxu0 0.0
  %912 = vmatpush2.msra.mxu0 0.0
  %913 = vmatprep.subr.mxu0 0.0
  %914 = vmatpush2.msra.mxu0 0.0
  %915 = vmatprep.subr.mxu0 0.0
  %916 = vmatpush2.msra.mxu0 0.0
  %917 = vmatprep.subr.mxu0 0.0
  %918 = vmatpush2.msra.mxu0 0.0
  %919 = vmatprep.subr.mxu0 0.0
  %920 = vmatpush2.msra.mxu0 0.0
  %921 = vmatprep.subr.mxu0 0.0
  %922 = vmatpush2.msra.mxu0 0.0
  %923 = vmatprep.subr.mxu0 0.0
  %924 = vmatpush2.msra.mxu0 0.0
  %925 = vmatprep.subr.mxu0 0.0
  %926 = vmatpush2.msra.mxu0 0.0
  %927 = vmatprep.subr.mxu0 0.0
  %928 = vmatpush2.msra.mxu0 0.0
  %929 = vmatprep.subr.mxu0 0.0
  %930 = vmatpush2.msra.mxu0 0.0
  %931 = vmatprep.subr.mxu0 0.0
  %932 = vmatpush2.msra.mxu0 0.0
  %933 = vmatprep.subr.mxu0 0.0
  %934 = vmatpush2.msra.mxu0 0.0
  %935 = vmatprep.subr.mxu0 0.0
  %936 = vmatpush2.msra.mxu0 0.0
  %937 = vmatprep.subr.mxu0 0.0
  %938 = vmatpush2.msra.mxu0 0.0
  %939 = vmatprep.subr.mxu0 0.0
  %940 = vmatpush2.msra.mxu0 0.0
  %941 = vmatprep.mubr.f32.mxu0 0.0
  %942 = vmatmul.mubr.f32.gmra.mxu0 %v804
  %v943 = vpop.f32.mrf.mxu0
  %v944 = vadd.f32 0.0, %v943
  %v945 = vpop.f32.mrf.mxu0
  %946 = vdwg.mxu0
  %s947 = scalar_lea.vmem [#allocation3], 12
  %v948 = vld [vmem:[%s947] sm:$0x3]
  %v949 = vadd.f32 %v948, %v874
  %s950 = scalar_lea.vmem [#allocation3], 14
  %v951 = vld [vmem:[%s950] sm:$0x3]
  %s952 = scalar_lea.vmem [#allocation4], 12
  %v953 = vld [vmem:[%s952] sm:$0x3]
  %v954 = vadd.f32 %v951, %v953
  %v955 = vadd.f32 %v954, %v944
  %956 = vst [vmem:[%s947] sm:$0x3] %v949
  %957 = vst [vmem:[%s950] sm:$0x3] %v955
  %958 = vst [vmem:[#allocation2] sm:$0x3] %v955
  %v959 = vld [vmem:[#allocation3] sm:$0x3]
  %v960 = vld [vmem:[#allocation3 + $0x2] sm:$0x3]
  %v961 = vld [vmem:[#allocation3 + $0x4] sm:$0x3]
  %v962 = vld [vmem:[#allocation3 + $0x6] sm:$0x3]
  %v963 = vld [vmem:[#allocation3 + $0x8] sm:$0x3]
  %v964 = vld [vmem:[#allocation3 + $0xa] sm:$0x3]
  %v965 = vld [vmem:[#allocation3 + $0xc] sm:$0x3]
  %v966 = vld [vmem:[#allocation3 + $0xe] sm:$0x3]
  %v975 = vcombine.low %v959, %v960
  %v976 = vcombine.low %v961, %v962
  %v978 = vunpack.c.l.s4 1983009808
  %v979 = vunpack.c.0.s8 %v978
  %v980 = vlaneseq
  %v981 = vshrl.u32 %v980, 7
  %v982 = vsub.s32 %v979, %v981
  %v983 = vrot.slane %v975, %v982
  %v985 = vunpack.c.l.s4 1983009808
  %v986 = vunpack.c.0.s8 %v985
  %v987 = vlaneseq
  %v988 = vshrl.u32 %v987, 7
  %v989 = vsub.s32 %v986, %v988
  %v990 = vrot.slane %v976, %v989
  %v991 = vcombine.low %v983, %v990
  %v992 = vcombine.low %v963, %v964
  %v993 = vcombine.low %v965, %v966
  %v995 = vunpack.c.l.s4 1983009808
  %v996 = vunpack.c.0.s8 %v995
  %v997 = vlaneseq
  %v998 = vshrl.u32 %v997, 7
  %v999 = vsub.s32 %v996, %v998
  %v1000 = vrot.slane %v992, %v999
  %v1002 = vunpack.c.l.s4 1983009808
  %v1003 = vunpack.c.0.s8 %v1002
  %v1004 = vlaneseq
  %v1005 = vshrl.u32 %v1004, 7
  %v1006 = vsub.s32 %v1003, %v1005
  %v1007 = vrot.slane %v993, %v1006
  %v1008 = vcombine.low %v1000, %v1007
  %v1011 = vpack.c.bf16 %v1008, %v991
  %v1012 = vld [vmem:[%s4] sm:$0xf]
  %v1013 = vld [vmem:[%s4 + $0x4] sm:$0xf]
  %v1014 = vld [vmem:[%s4 + $0x8] sm:$0xf]
  %v1015 = vld [vmem:[%s4 + $0xc] sm:$0xf]
  %v1016 = vld [vmem:[%s4 + $0x10] sm:$0xf]
  %v1017 = vld [vmem:[%s4 + $0x14] sm:$0xf]
  %v1018 = vld [vmem:[%s4 + $0x18] sm:$0xf]
  %v1019 = vld [vmem:[%s4 + $0x1c] sm:$0xf]
  %v1020 = vld [vmem:[%s4 + $0x20] sm:$0xf]
  %v1021 = vld [vmem:[%s4 + $0x24] sm:$0xf]
  %v1022 = vld [vmem:[%s4 + $0x28] sm:$0xf]
  %v1023 = vld [vmem:[%s4 + $0x2c] sm:$0xf]
  %v1024 = vld [vmem:[%s4 + $0x30] sm:$0xf]
  %v1025 = vld [vmem:[%s4 + $0x34] sm:$0xf]
  %v1026 = vld [vmem:[%s4 + $0x38] sm:$0xf]
  %v1027 = vld [vmem:[%s4 + $0x3c] sm:$0xf]
  %v1044 = vunpack.c.l.b16 %v1012
  %v1045 = vunpack.c.l.b16 %v1013
  %v1046 = vunpack.c.l.b16 %v1014
  %v1047 = vunpack.c.l.b16 %v1015
  %v1048 = vunpack.c.l.b16 %v1016
  %v1049 = vunpack.c.l.b16 %v1017
  %v1050 = vunpack.c.l.b16 %v1018
  %v1051 = vunpack.c.l.b16 %v1019
  %v1052 = vunpack.c.l.b16 %v1020
  %v1053 = vunpack.c.l.b16 %v1021
  %v1054 = vunpack.c.l.b16 %v1022
  %v1055 = vunpack.c.l.b16 %v1023
  %v1056 = vunpack.c.l.b16 %v1024
  %v1057 = vunpack.c.l.b16 %v1025
  %v1058 = vunpack.c.l.b16 %v1026
  %v1059 = vunpack.c.l.b16 %v1027
  %v1060 = vpack.c.b16 %v1045, %v1044
  %v1061 = vpack.c.b16 %v1047, %v1046
  %v1062 = vpack.c.b16 %v1049, %v1048
  %v1063 = vpack.c.b16 %v1051, %v1050
  %v1064 = vpack.c.b16 %v1053, %v1052
  %v1065 = vpack.c.b16 %v1055, %v1054
  %v1066 = vpack.c.b16 %v1057, %v1056
  %v1067 = vpack.c.b16 %v1059, %v1058
  %1076 = vmatprep.subr.bf16.mxu0 0
  %1077 = vmatpush1.bf16.msra.mxu0 %v1067
  %1078 = vmatprep.subr.bf16.mxu0 0
  %1079 = vmatpush1.bf16.msra.mxu0 %v1066
  %1080 = vmatprep.subr.bf16.mxu0 0
  %1081 = vmatpush1.bf16.msra.mxu0 %v1065
  %1082 = vmatprep.subr.bf16.mxu0 0
  %1083 = vmatpush1.bf16.msra.mxu0 %v1064
  %1084 = vmatprep.subr.bf16.mxu0 0
  %1085 = vmatpush1.bf16.msra.mxu0 %v1063
  %1086 = vmatprep.subr.bf16.mxu0 0
  %1087 = vmatpush1.bf16.msra.mxu0 %v1062
  %1088 = vmatprep.subr.bf16.mxu0 0
  %1089 = vmatpush1.bf16.msra.mxu0 %v1061
  %1090 = vmatprep.subr.bf16.mxu0 0
  %1091 = vmatpush1.bf16.msra.mxu0 %v1060
  %1092 = vmatprep.subr.bf16.mxu0 0
  %1093 = vmatpush2.bf16.msra.mxu0 0
  %1094 = vmatprep.subr.bf16.mxu0 0
  %1095 = vmatpush2.bf16.msra.mxu0 0
  %1096 = vmatprep.subr.bf16.mxu0 0
  %1097 = vmatpush2.bf16.msra.mxu0 0
  %1098 = vmatprep.subr.bf16.mxu0 0
  %1099 = vmatpush2.bf16.msra.mxu0 0
  %1100 = vmatprep.subr.bf16.mxu0 0
  %1101 = vmatpush2.bf16.msra.mxu0 0
  %1102 = vmatprep.subr.bf16.mxu0 0
  %1103 = vmatpush2.bf16.msra.mxu0 0
  %1104 = vmatprep.subr.bf16.mxu0 0
  %1105 = vmatpush2.bf16.msra.mxu0 0
  %1106 = vmatprep.subr.bf16.mxu0 0
  %1107 = vmatpush2.bf16.msra.mxu0 0
  %1108 = vmatprep.mubr.bf16.mxu0 0
  %1109 = vmatmul.mubr.bf16.gmra.mxu0 %v1011
  %v1110 = vpop.f32.mrf.mxu0
  %v1111 = vadd.f32 0.0, %v1110
  %v1112 = vpop.f32.mrf.mxu0
  %v1113 = vpop.f32.mrf.mxu0
  %v1114 = vadd.f32 0.0, %v1113
  %v1115 = vpop.f32.mrf.mxu0
  %1116 = vdwg.mxu0
  %v1119 = vcombine.high %v1111, %v1111
  %v1121 = vunpack.c.l.s4 1983009808
  %v1122 = vunpack.c.0.s8 %v1121
  %v1123 = vlaneseq
  %v1124 = vshrl.u32 %v1123, 7
  %v1125 = vsub.s32 %v1122, %v1124
  %v1126 = vrot.slane %v1111, %v1125
  %v1128 = vunpack.c.l.s4 1983009808
  %v1129 = vunpack.c.0.s8 %v1128
  %v1130 = vlaneseq
  %v1131 = vshrl.u32 %v1130, 7
  %v1132 = vsub.s32 %v1129, %v1131
  %v1133 = vrot.slane %v1119, %v1132
  %v1134 = vcombine.high %v1126, %v1126
  %v1135 = vcombine.high %v1133, %v1133
  %v1136 = vcombine.high %v1114, %v1114
  %v1138 = vunpack.c.l.s4 1983009808
  %v1139 = vunpack.c.0.s8 %v1138
  %v1140 = vlaneseq
  %v1141 = vshrl.u32 %v1140, 7
  %v1142 = vsub.s32 %v1139, %v1141
  %v1143 = vrot.slane %v1114, %v1142
  %v1145 = vunpack.c.l.s4 1983009808
  %v1146 = vunpack.c.0.s8 %v1145
  %v1147 = vlaneseq
  %v1148 = vshrl.u32 %v1147, 7
  %v1149 = vsub.s32 %v1146, %v1148
  %v1150 = vrot.slane %v1136, %v1149
  %v1151 = vcombine.high %v1143, %v1143
  %v1152 = vcombine.high %v1150, %v1150
  %1161 = vst [vmem:[%s5] sm:$0x3] %v1126
  %1162 = vst [vmem:[%s5 + $0x2] sm:$0x3] %v1134
  %1163 = vst [vmem:[%s5 + $0x4] sm:$0x3] %v1133
  %1164 = vst [vmem:[%s5 + $0x6] sm:$0x3] %v1135
  %1165 = vst [vmem:[%s5 + $0x8] sm:$0x3] %v1143
  %1166 = vst [vmem:[%s5 + $0xa] sm:$0x3] %v1151
  %1167 = vst [vmem:[%s5 + $0xc] sm:$0x3] %v1150
  %1168 = vst [vmem:[%s5 + $0xe] sm:$0x3] %v1152
  // Predicated region
  $region26: #{linear_rnn.1} parent=0 // pred_check
    _
  $region27: #{linear_rnn.1} parent=0 // pred_check_branch
    %1170 = sbr.rel (0) target = $region29
  $region28: #{linear_rnn.1} parent=0 // pred_region
    _
  $region29: #{linear_rnn.1} parent=0 // pred_fallthru
    _
  // Predicated region
  $region30: #{linear_rnn.1} parent=0 // pred_check
    _
  $region31: #{linear_rnn.1} parent=0 // pred_check_branch
    %1172 = sbr.rel (0) target = $region33
  $region32: #{linear_rnn.1} parent=0 // pred_region
    _
  $region33: #{linear_rnn.1} parent=0 // pred_fallthru
    _

</llo_original>
